<compile_context>
chip_gen: v6e
topology: v6e:2x2x1
jax: 0.10.0
libtpu: 0.0.40
codegen_flags: <defaults>
</compile_context>

<pallas_src>
import functools

import jax
import jax.numpy as jnp
import numpy as np
from jax import lax
from jax.experimental import pallas as pl
from jax.experimental.pallas import tpu as pltpu

LN_EPS = 1e-6
NEG_INF = -1e9


def _round_up(x, m):
    return (x + m - 1) // m * m


# --------------------------- in-kernel math ---------------------------------

def _layernorm(x, g, b, true_h, lane_mask):
    """BERT-pytorch LayerNorm (unbiased std, eps added to std).

    x has zeros in padded lanes; statistics use the true hidden width only.
    Exact reciprocal here (off the MXU critical path)."""
    mean = jnp.sum(x, axis=-1, keepdims=True) * (1.0 / true_h)
    d = x - mean
    if lane_mask is not None:
        d = d * lane_mask                    # keep padded lanes out of var
    var = jnp.sum(d * d, axis=-1, keepdims=True) * (1.0 / (true_h - 1))
    inv = 1.0 / (jnp.sqrt(var) + LN_EPS)
    return g * (d * inv) + b                 # g,b zero in padded lanes


def _softmax(x):
    m = jnp.max(x, axis=-1, keepdims=True)
    e = jnp.exp(x - m)
    return e * pl.reciprocal(jnp.sum(e, axis=-1, keepdims=True), approx=True)


def _gelu(x):
    # tanh approximation (BERT-pytorch GELU)
    return 0.5 * x * (1.0 + jnp.tanh(
        jnp.sqrt(2.0 / jnp.pi) * (x + 0.044715 * x * x * x)))


# ---------------------- fused encoder-stack kernel --------------------------

def encoder_stack_kernel(x_ref, bias_ref,
                         ln1g_ref, ln1b_ref, wqkv_ref, bqkv_ref,
                         wo_ref, bo_ref,
                         ln2g_ref, ln2b_ref, w1_ref, b1_ref, w2_ref, b2_ref,
                         o_ref, ctx_ref, *, num_heads, dh_pad, true_h):
    """One grid step = one encoder layer applied to a (Bt, Sp, Hp) batch tile.

    The output block index is constant along the layer grid axis, so o_ref is
    the VMEM-resident residual stream across all layers of this batch tile.
    All big matmuls run on the flattened (Bt*Sp, Hp) slab; only the per-head
    scores / softmax / ctx stay inside the (small) per-sequence loop.
    """
    layer = pl.program_id(1)

    @pl.when(layer == 0)
    def _():
        o_ref[...] = x_ref[...]              # initialize residual stream

    Bt, Sp, Hp = x_ref.shape
    R = Bt * Sp
    Dq = num_heads * dh_pad

    lane_mask = None
    if Hp != true_h:                          # masked LayerNorm statistics
        lane_mask = (lax.broadcasted_iota(jnp.int32, (1, Hp), 1) < true_h
                     ).astype(jnp.float32)

    # Flatten batch tile into the matmul M dimension (cheap: merges the two
    # non-lane dims, Sp is already a multiple of 8 sublanes).
    h = o_ref[...].reshape(R, Hp)             # residual stream, f32

    # ---- self-attention sublayer (pre-norm) ----
    n1 = _layernorm(h, ln1g_ref[0], ln1b_ref[0], true_h, lane_mask)
    # Fused QKV projection, M = Bt*Sp, lane-aligned head blocks of width dh_pad.
    # 1/sqrt(dh) is already folded into the q columns of wqkv / bqkv.
    qkv = (jnp.dot(n1.astype(jnp.bfloat16), wqkv_ref[0],
                   preferred_element_type=jnp.float32)
           + bqkv_ref[0])                     # (R, 3*Dq)

    for bi in range(Bt):                      # per-sequence attention
        r0 = bi * Sp
        bias = bias_ref[bi]                   # (1, Sp) additive key mask
        for hd in range(num_heads):
            c0 = hd * dh_pad                  # 128-aligned lane slice
            q = qkv[r0:r0 + Sp, c0:c0 + dh_pad]
            k = qkv[r0:r0 + Sp, Dq + c0:Dq + c0 + dh_pad]
            v = qkv[r0:r0 + Sp, 2 * Dq + c0:2 * Dq + c0 + dh_pad]
            sc = lax.dot_general(q.astype(jnp.bfloat16), k.astype(jnp.bfloat16),
                                 dimension_numbers=(((1,), (1,)), ((), ())),
                                 preferred_element_type=jnp.float32)
            p = _softmax(sc + bias)
            ctx = jnp.dot(p.astype(jnp.bfloat16), v.astype(jnp.bfloat16),
                          preferred_element_type=jnp.float32)
            # lane-aligned "concat heads" write into the VMEM context scratch
            ctx_ref[r0:r0 + Sp, c0:c0 + dh_pad] = ctx.astype(jnp.bfloat16)

    # single full-depth (K = Dq) output projection of the attention sublayer
    attn = jnp.dot(ctx_ref[...], wo_ref[0],
                   preferred_element_type=jnp.float32) + bo_ref[0]
    h = h + attn                              # residual (dropout == identity)

    # ---- position-wise feed-forward sublayer (pre-norm) ----
    # TODO(synk): if Bt*Sp*Fp*4 ever dominates VMEM, chunk over Fp and accumulate.
    n2 = _layernorm(h, ln2g_ref[0], ln2b_ref[0], true_h, lane_mask)
    a = _gelu(jnp.dot(n2.astype(jnp.bfloat16), w1_ref[0],
                      preferred_element_type=jnp.float32) + b1_ref[0])
    h = h + jnp.dot(a.astype(jnp.bfloat16), w2_ref[0],
                    preferred_element_type=jnp.float32) + b2_ref[0]

    o_ref[...] = h.reshape(Bt, Sp, Hp)


def _encoder_vmem_estimate(Bt, Sp, Hp, Dq, Fp):
    """Rough per-grid-step VMEM footprint (bytes) of the fused encoder."""
    R = Bt * Sp
    act = R * Hp * 4
    blocks = 2 * act + 2 * act                       # x (2-buf) + o block
    weights = 2 * 2 * (Hp * 3 * Dq + Dq * Hp + Hp * Fp + Fp * Hp)  # bf16, 2-buf
    scratch = R * Dq * 2                             # ctx (bf16)
    temps = R * (3 * Dq + Fp + 3 * Hp) * 4           # qkv / ffn act / n1,n2,attn
    return blocks + weights + scratch + temps


def _pick_batch_tile(B, Sp, Hp, Dq, Fp, budget=24 << 20):
    """Largest Bt dividing B that fits the VMEM budget and keeps >=2 steps on
    the parallel grid axis (v7x has 2 TensorCores)."""
    best = 1
    for bt in range(1, B + 1):
        if B % bt:
            continue
        if B >= 2 and B // bt < 2:
            continue
        if _encoder_vmem_estimate(bt, Sp, Hp, Dq, Fp) <= budget:
            best = bt
    return best


def encoder_stack(x, bias, kp, *, num_heads, dh_pad, true_h,
                  batch_tile=None, vmem_limit_bytes=48 << 20):
    """x: (B, Sp, Hp) f32, bias: (B, 1, Sp) additive mask, kp: stacked params."""
    B, Sp, Hp = x.shape
    L = kp["wqkv"].shape[0]
    Dq = kp["wo"].shape[1]
    Fp = kp["w1"].shape[-1]

    Bt = (_pick_batch_tile(B, Sp, Hp, Dq, Fp) if batch_tile is None
          else batch_tile)
    assert B % Bt == 0

    def wspec(a, b):
        return pl.BlockSpec((1, a, b), lambda i, l: (l, 0, 0))

    kernel = functools.partial(encoder_stack_kernel, num_heads=num_heads,
                               dh_pad=dh_pad, true_h=true_h)

    return pl.pallas_call(
        kernel,
        out_shape=jax.ShapeDtypeStruct((B, Sp, Hp), jnp.float32),
        grid=(B // Bt, L),
        in_specs=[
            pl.BlockSpec((Bt, Sp, Hp), lambda i, l: (i, 0, 0)),   # embeddings
            pl.BlockSpec((Bt, 1, Sp), lambda i, l: (i, 0, 0)),    # mask bias
            wspec(1, Hp), wspec(1, Hp),                           # ln1 g, b
            wspec(Hp, 3 * Dq), wspec(1, 3 * Dq),                  # wqkv, bqkv
            wspec(Dq, Hp), wspec(1, Hp),                          # wo, bo
            wspec(1, Hp), wspec(1, Hp),                           # ln2 g, b
            wspec(Hp, Fp), wspec(1, Fp),                          # w1, b1
            wspec(Fp, Hp), wspec(1, Hp),                          # w2, b2
        ],
        out_specs=pl.BlockSpec((Bt, Sp, Hp), lambda i, l: (i, 0, 0)),
        scratch_shapes=[pltpu.VMEM((Bt * Sp, Dq), jnp.bfloat16)],  # head ctxs
        input_output_aliases={0: 0},       # reuse embedding buffer for output
        compiler_params=pltpu.CompilerParams(
            dimension_semantics=("parallel", "arbitrary"),
            vmem_limit_bytes=vmem_limit_bytes),
    )(x, bias,
      kp["ln1_g"], kp["ln1_b"], kp["wqkv"], kp["bqkv"], kp["wo"], kp["bo"],
      kp["ln2_g"], kp["ln2_b"], kp["w1"], kp["b1"], kp["w2"], kp["b2"])


# ------------------------ output projection kernel --------------------------

def out_proj_kernel(x_ref, w_ref, b_ref, o_ref):
    o_ref[...] = (jnp.dot(x_ref[...].astype(jnp.bfloat16), w_ref[...],
                          preferred_element_type=jnp.float32)
                  + b_ref[...]).astype(o_ref.dtype)


def out_projection(h2d, w_bf16, b, *, vmem_limit_bytes=32 << 20):
    """h2d: (R, Hp) f32; w: (Hp, Vp) bf16 (pre-padded); b: (1, Vp) f32."""
    R, Hp = h2d.shape
    Vp = w_bf16.shape[1]

    tr = min(512, _round_up(R, 8))
    Rp = _round_up(R, tr)
    tv = min(1024, Vp)                 # Vp is a multiple of tv by construction
    assert Vp % tv == 0

    x = jnp.pad(h2d, ((0, Rp - R), (0, 0))) if Rp != R else h2d

    out = pl.pallas_call(
        out_proj_kernel,
        out_shape=jax.ShapeDtypeStruct((Rp, Vp), jnp.float32),
        grid=(Rp // tr, Vp // tv),
        in_specs=[
            pl.BlockSpec((tr, Hp), lambda r, v: (r, 0)),
            pl.BlockSpec((Hp, tv), lambda r, v: (0, v)),
            pl.BlockSpec((1, tv), lambda r, v: (0, v)),
        ],
        out_specs=pl.BlockSpec((tr, tv), lambda r, v: (r, v)),
        compiler_params=pltpu.CompilerParams(
            dimension_semantics=("parallel", "parallel"),
            vmem_limit_bytes=vmem_limit_bytes),
    )(x, w_bf16, b)
    return out[:R]


# ------------------------------ param prep -----------------------------------
# Called ONCE, outside jit: pads H / dh / F / V to 128-lane multiples, folds
# 1/sqrt(dh) into wq/bq, stacks per-layer params and pre-casts matmul weights
# to bf16.  All padding is with zeros -> numerically exact.

def prepare_model(params, num_heads):
    layers = params["layers"]
    H = params["tok_emb"].shape[1]
    V = params["w_out"].shape[1]
    F = layers[0]["w1"].shape[1]
    dh = H // num_heads
    Hp = _round_up(H, 128)
    dhp = _round_up(dh, 128)
    Dq = num_heads * dhp
    Fp = _round_up(F, 128)
    scale = 1.0 / (dh ** 0.5)

    def pad_to(a, shape):
        return jnp.pad(a, [(0, t - s) for s, t in zip(a.shape, shape)])

    def head_cols(w, b, s=1.0):
        # (H, H)/(1, H) -> (Hp, Dq)/(1, Dq) with head hd at cols [hd*dhp, +dh)
        wc = [pad_to(w[:, hd * dh:(hd + 1) * dh] * s, (H, dhp))
              for hd in range(num_heads)]
        bc = [pad_to(b[:, hd * dh:(hd + 1) * dh] * s, (1, dhp))
              for hd in range(num_heads)]
        return pad_to(jnp.concatenate(wc, axis=1), (Hp, Dq)), \
               jnp.concatenate(bc, axis=1)

    def head_rows(w):
        # (H, H) -> (Dq, Hp) with head hd's rows at [hd*dhp, +dh)
        rows = [pad_to(w[hd * dh:(hd + 1) * dh, :], (dhp, H))
                for hd in range(num_heads)]
        return pad_to(jnp.concatenate(rows, axis=0), (Dq, Hp))

    acc = {k: [] for k in ("ln1_g", "ln1_b", "wqkv", "bqkv", "wo", "bo",
                           "ln2_g", "ln2_b", "w1", "b1", "w2", "b2")}
    for p in layers:
        wq, bq = head_cols(p["wq"], p["bq"], scale)   # fold 1/sqrt(dh) into q
        wk, bk = head_cols(p["wk"], p["bk"])
        wv, bv = head_cols(p["wv"], p["bv"])
        acc["wqkv"].append(jnp.concatenate([wq, wk, wv], axis=1))
        acc["bqkv"].append(jnp.concatenate([bq, bk, bv], axis=1))
        acc["wo"].append(head_rows(p["wo"]))
        acc["bo"].append(pad_to(p["bo"], (1, Hp)))
        acc["ln1_g"].append(pad_to(p["ln1_g"], (1, Hp)))
        acc["ln1_b"].append(pad_to(p["ln1_b"], (1, Hp)))
        acc["ln2_g"].append(pad_to(p["ln2_g"], (1, Hp)))
        acc["ln2_b"].append(pad_to(p["ln2_b"], (1, Hp)))
        acc["w1"].append(pad_to(p["w1"], (Hp, Fp)))
        acc["b1"].append(pad_to(p["b1"], (1, Fp)))
        acc["w2"].append(pad_to(p["w2"], (Fp, Hp)))
        acc["b2"].append(pad_to(p["b2"], (1, Hp)))

    kp = {k: jnp.stack(v) for k, v in acc.items()}
    for k in ("wqkv", "wo", "w1", "w2"):
        kp[k] = kp[k].astype(jnp.bfloat16)

    # embeddings padded to Hp (zeros in the padded lanes)
    kp["tok_emb"] = pad_to(params["tok_emb"], (params["tok_emb"].shape[0], Hp))
    kp["pos_emb"] = pad_to(params["pos_emb"], (params["pos_emb"].shape[0], Hp))

    # vocab projection: pad V so it is a multiple of the tile width, cast bf16
    Vp128 = _round_up(V, 128)
    tv = min(1024, Vp128)
    Vp = _round_up(V, tv)
    kp["w_out"] = pad_to(params["w_out"], (Hp, Vp)).astype(jnp.bfloat16)
    kp["b_out"] = pad_to(params["b_out"], (1, Vp))

    dims = dict(num_heads=num_heads, hidden=H, vocab=V, dhp=dhp)
    return kp, dims


# ------------------------------ forward --------------------------------------

def bert4rec_forward(x_ids, kp, *, dims, batch_tile=None):
    """x_ids: int32 [B, S] item ids (0 = padding) -> [B, S, num_items+1]."""
    B, S = x_ids.shape
    H, V = dims["hidden"], dims["vocab"]
    num_heads, dhp = dims["num_heads"], dims["dhp"]
    Hp = kp["tok_emb"].shape[1]
    Vp = kp["w_out"].shape[1]
    Sp = _round_up(S, 8)                   # sublane-aligned sequence

    # Embedding lookup is glue (data-dependent gather) in plain JAX.
    emb = kp["tok_emb"][x_ids] + kp["pos_emb"][None, :S, :]
    bias = jnp.where(x_ids > 0, 0.0, NEG_INF).astype(jnp.float32)   # (B, S)
    if Sp != S:
        emb = jnp.pad(emb, ((0, 0), (0, Sp - S), (0, 0)))
        bias = jnp.pad(bias, ((0, 0), (0, Sp - S)), constant_values=NEG_INF)
    bias = bias.reshape(B, 1, Sp)

    h = encoder_stack(emb, bias, kp, num_heads=num_heads, dh_pad=dhp,
                      true_h=H, batch_tile=batch_tile)

    logits = out_projection(h.reshape(B * Sp, Hp), kp["w_out"], kp["b_out"])
    return logits.reshape(B, Sp, Vp)[:, :S, :V]


# ------------------------- pure-JAX reference --------------------------------

def _layernorm_ref(x, g, b):
    mean = jnp.mean(x, axis=-1, keepdims=True)
    var = jnp.sum((x - mean) ** 2, axis=-1, keepdims=True) / (x.shape[-1] - 1)
    return g * (x - mean) / (jnp.sqrt(var) + LN_EPS) + b


def _softmax_ref(x):
    m = jnp.max(x, axis=-1, keepdims=True)
    e = jnp.exp(x - m)
    return e / jnp.sum(e, axis=-1, keepdims=True)


def bert4rec_reference(x_ids, params, num_heads):
    B, S = x_ids.shape
    mask = (x_ids > 0).astype(jnp.float32)
    h = params["tok_emb"][x_ids] + params["pos_emb"][None, :S, :]
    H = h.shape[-1]
    dh = H // num_heads
    for p in params["layers"]:
        ln = _layernorm_ref(h, p["ln1_g"][0], p["ln1_b"][0])
        q = ln @ p["wq"] + p["bq"][0]
        k = ln @ p["wk"] + p["bk"][0]
        v = ln @ p["wv"] + p["bv"][0]
        ctx = []
        for hd in range(num_heads):
            s0 = hd * dh
            qh, kh, vh = q[..., s0:s0 + dh], k[..., s0:s0 + dh], v[..., s0:s0 + dh]
            sc = jnp.einsum("bqd,bkd->bqk", qh, kh) / jnp.sqrt(jnp.float32(dh))
            sc = jnp.where(mask[:, None, :] > 0, sc, NEG_INF)
            pr = _softmax_ref(sc)
            ctx.append(jnp.einsum("bqk,bkd->bqd", pr, vh))
        h = h + (jnp.concatenate(ctx, axis=-1) @ p["wo"] + p["bo"][0])
        ln = _layernorm_ref(h, p["ln2_g"][0], p["ln2_b"][0])
        h = h + (_gelu(ln @ p["w1"] + p["b1"][0]) @ p["w2"] + p["b2"][0])
    return h @ params["w_out"] + params["b_out"][0]


# ------------------------------- params --------------------------------------

def init_params(key, vocab, max_len, hidden, ffn, n_layers):
    keys = jax.random.split(key, 3 + n_layers)

    def dense(k, fan_in, fan_out):
        w = jax.random.normal(k, (fan_in, fan_out), jnp.float32) * 0.02
        return w, jnp.zeros((1, fan_out), jnp.float32)

    tok = jax.random.normal(keys[0], (vocab, hidden), jnp.float32) * 0.02
    tok = tok.at[0].set(0.0)  # padding_idx = 0
    pos = jax.random.normal(keys[1], (max_len, hidden), jnp.float32) * 0.02

    layers = []
    for i in range(n_layers):
        lk = jax.random.split(keys[2 + i], 6)
        wq, bq = dense(lk[0], hidden, hidden)
        wk, bk = dense(lk[1], hidden, hidden)
        wv, bv = dense(lk[2], hidden, hidden)
        wo, bo = dense(lk[3], hidden, hidden)
        w1, b1 = dense(lk[4], hidden, ffn)
        w2, b2 = dense(lk[5], ffn, hidden)
        layers.append(dict(
            wq=wq, bq=bq, wk=wk, bk=bk, wv=wv, bv=bv, wo=wo, bo=bo,
            w1=w1, b1=b1, w2=w2, b2=b2,
            ln1_g=jnp.ones((1, hidden), jnp.float32),
            ln1_b=jnp.zeros((1, hidden), jnp.float32),
            ln2_g=jnp.ones((1, hidden), jnp.float32),
            ln2_b=jnp.zeros((1, hidden), jnp.float32),
        ))

    w_out, b_out = dense(keys[2 + n_layers], hidden, vocab)
    return dict(tok_emb=tok, pos_emb=pos, layers=layers,
                w_out=w_out, b_out=b_out)


# -------------------------------- main ----------------------------------------

if __name__ == "__main__":
    B, MAX_LEN, NUM_ITEMS = 2, 16, 49
    N_LAYERS, NUM_HEADS, HIDDEN = 2, 2, 32
    VOCAB = NUM_ITEMS + 1

    key = jax.random.PRNGKey(0)
    kx, kparam = jax.random.split(key)
    x = jax.random.randint(kx, (B, MAX_LEN), 0, VOCAB, dtype=jnp.int32)
    x = x.at[:, :3].set(0)  # some padding positions to exercise the mask

    params = init_params(kparam, VOCAB, MAX_LEN, HIDDEN, HIDDEN * 4, N_LAYERS)

    # Pad / stack / bf16-cast weights ONCE, outside the jitted forward.
    kp, dims = prepare_model(params, NUM_HEADS)

    fwd = jax.jit(functools.partial(bert4rec_forward, dims=dims))
    out = jax.block_until_ready(fwd(x, kp))
    assert out.shape == (B, MAX_LEN, VOCAB)

    ref = bert4rec_reference(x, params, NUM_HEADS)
    # bf16 matmul inputs + approx softmax reciprocal vs pure-f32 reference.
    np.testing.assert_allclose(np.asarray(out), np.asarray(ref),
                               rtol=2e-2, atol=2e-2)
    print("KERNEL_OK")
</pallas_src>

<mosaic_0001>
module attributes {stable_mosaic.version = 11 : i64} {
  func.func @out_proj_kernel(%arg0: i32, %arg1: i32, %arg2: memref<32x128xf32, #tpu.memory_space<vmem>>, %arg3: memref<128x128xbf16, #tpu.memory_space<vmem>>, %arg4: memref<1x128xf32, #tpu.memory_space<vmem>>, %arg5: memref<32x128xf32, #tpu.memory_space<vmem>>) attributes {dimension_semantics = [#tpu.dimension_semantics<parallel>, #tpu.dimension_semantics<parallel>], iteration_bounds = array<i64: 1, 1>, scalar_prefetch = 0 : i64, scratch_operands = 0 : i64, tpu.core_type = #tpu.core_type<tc>, window_params = [{transform_indices = @transform_0, window_bounds = array<i64: 32, 128>}, {transform_indices = @transform_1, window_bounds = array<i64: 128, 128>}, {transform_indices = @transform_2, window_bounds = array<i64: 1, 128>}, {transform_indices = @transform_3, window_bounds = array<i64: 32, 128>}]} {
    %c0 = arith.constant 0 : index
    %c0_0 = arith.constant 0 : index
    %0 = vector.load %arg2[%c0, %c0_0] : memref<32x128xf32, #tpu.memory_space<vmem>>, vector<32x128xf32>
    %1 = arith.truncf %0 : vector<32x128xf32> to vector<32x128xbf16>
    %c0_1 = arith.constant 0 : index
    %c0_2 = arith.constant 0 : index
    %2 = vector.load %arg3[%c0_1, %c0_2] : memref<128x128xbf16, #tpu.memory_space<vmem>>, vector<128x128xbf16>
    %cst = arith.constant dense<0.000000e+00> : vector<32x128xf32>
    %3 = tpu.matmul %1, %2, %cst {dimension_numbers = #tpu.dot_dimension_numbers<[1], [0], [0], [1], [0, 0, 1, 1], [], []>} : vector<32x128xbf16>, vector<128x128xbf16>, vector<32x128xf32> -> vector<32x128xf32>
    %c0_3 = arith.constant 0 : index
    %c0_4 = arith.constant 0 : index
    %4 = vector.load %arg4[%c0_3, %c0_4] : memref<1x128xf32, #tpu.memory_space<vmem>>, vector<1x128xf32>
    %5 = vector.broadcast %4 : vector<1x128xf32> to vector<32x128xf32>
    %6 = arith.addf %3, %5 : vector<32x128xf32>
    %c0_5 = arith.constant 0 : index
    %c0_6 = arith.constant 0 : index
    %7 = vector.load %arg5[%c0_5, %c0_6] : memref<32x128xf32, #tpu.memory_space<vmem>>, vector<32x128xf32>
    tpu.vector_store %arg5[%c0_5, %c0_6], %6 {strides = array<i32>} : memref<32x128xf32, #tpu.memory_space<vmem>>, vector<32x128xf32>,
    return
  }
  func.func @transform_0(%arg0: i32, %arg1: i32) -> (i32, i32) {
    %c0_i32 = arith.constant 0 : i32
    %c0_i32_0 = arith.constant 0 : i32
    return %arg0, %c0_i32 : i32, i32
  }
  func.func @transform_1(%arg0: i32, %arg1: i32) -> (i32, i32) {
    %c0_i32 = arith.constant 0 : i32
    %c0_i32_0 = arith.constant 0 : i32
    return %c0_i32, %arg1 : i32, i32
  }
  func.func @transform_2(%arg0: i32, %arg1: i32) -> (i32, i32) {
    %c0_i32 = arith.constant 0 : i32
    %c0_i32_0 = arith.constant 0 : i32
    return %c0_i32, %arg1 : i32, i32
  }
  func.func @transform_3(%arg0: i32, %arg1: i32) -> (i32, i32) {
    %c0_i32 = arith.constant 0 : i32
    return %arg0, %arg1 : i32, i32
  }
}

module attributes {stable_mosaic.version = 11 : i64} {
  func.func @encoder_stack_kernel(%arg0: i32, %arg1: i32, %arg2: memref<1x16x128xf32, #tpu.memory_space<vmem>>, %arg3: memref<1x1x16xf32, #tpu.memory_space<vmem>>, %arg4: memref<1x1x128xf32, #tpu.memory_space<vmem>>, %arg5: memref<1x1x128xf32, #tpu.memory_space<vmem>>, %arg6: memref<1x128x768xbf16, #tpu.memory_space<vmem>>, %arg7: memref<1x1x768xf32, #tpu.memory_space<vmem>>, %arg8: memref<1x256x128xbf16, #tpu.memory_space<vmem>>, %arg9: memref<1x1x128xf32, #tpu.memory_space<vmem>>, %arg10: memref<1x1x128xf32, #tpu.memory_space<vmem>>, %arg11: memref<1x1x128xf32, #tpu.memory_space<vmem>>, %arg12: memref<1x128x128xbf16, #tpu.memory_space<vmem>>, %arg13: memref<1x1x128xf32, #tpu.memory_space<vmem>>, %arg14: memref<1x128x128xbf16, #tpu.memory_space<vmem>>, %arg15: memref<1x1x128xf32, #tpu.memory_space<vmem>>, %arg16: memref<1x16x128xf32, #tpu.memory_space<vmem>>, %arg17: memref<16x256xbf16, #tpu.memory_space<vmem>>) attributes {dimension_semantics = [#tpu.dimension_semantics<parallel>, #tpu.dimension_semantics<arbitrary>], iteration_bounds = array<i64: 2, 2>, scalar_prefetch = 0 : i64, scratch_operands = 1 : i64, tpu.core_type = #tpu.core_type<tc>, window_params = [{transform_indices = @transform_0, window_bounds = array<i64: 1, 16, 128>}, {transform_indices = @transform_1, window_bounds = array<i64: 1, 1, 16>}, {transform_indices = @transform_2, window_bounds = array<i64: 1, 1, 128>}, {transform_indices = @transform_3, window_bounds = array<i64: 1, 1, 128>}, {transform_indices = @transform_4, window_bounds = array<i64: 1, 128, 768>}, {transform_indices = @transform_5, window_bounds = array<i64: 1, 1, 768>}, {transform_indices = @transform_6, window_bounds = array<i64: 1, 256, 128>}, {transform_indices = @transform_7, window_bounds = array<i64: 1, 1, 128>}, {transform_indices = @transform_8, window_bounds = array<i64: 1, 1, 128>}, {transform_indices = @transform_9, window_bounds = array<i64: 1, 1, 128>}, {transform_indices = @transform_10, window_bounds = array<i64: 1, 128, 128>}, {transform_indices = @transform_11, window_bounds = array<i64: 1, 1, 128>}, {transform_indices = @transform_12, window_bounds = array<i64: 1, 128, 128>}, {transform_indices = @transform_13, window_bounds = array<i64: 1, 1, 128>}, {transform_indices = @transform_14, window_bounds = array<i64: 1, 16, 128>}]} {
    %c0_i32 = arith.constant 0 : i32
    %0 = arith.cmpi eq, %arg1, %c0_i32 : i32
    %1 = arith.extui %0 : i1 to i32
    %c0_i32_0 = arith.constant 0 : i32
    %2 = arith.cmpi ne, %1, %c0_i32_0 : i32
    scf.if %2 {
      %c0_77 = arith.constant 0 : index
      %c0_78 = arith.constant 0 : index
      %c0_79 = arith.constant 0 : index
      %164 = vector.load %arg2[%c0_77, %c0_78, %c0_79] : memref<1x16x128xf32, #tpu.memory_space<vmem>>, vector<1x16x128xf32>
      %c0_80 = arith.constant 0 : index
      %c0_81 = arith.constant 0 : index
      %c0_82 = arith.constant 0 : index
      %165 = vector.load %arg16[%c0_80, %c0_81, %c0_82] : memref<1x16x128xf32, #tpu.memory_space<vmem>>, vector<1x16x128xf32>
      tpu.vector_store %arg16[%c0_80, %c0_81, %c0_82], %164 {strides = array<i32>} : memref<1x16x128xf32, #tpu.memory_space<vmem>>, vector<1x16x128xf32>,
    } else {
    }
    %3 = tpu.iota {dimensions = array<i32: 1>} : vector<1x128xi32>
    %c32_i32 = arith.constant 32 : i32
    %4 = vector.broadcast %c32_i32 : i32 to vector<1x128xi32>
    %5 = arith.cmpi slt, %3, %4 : vector<1x128xi32>
    %6 = arith.extui %5 : vector<1x128xi1> to vector<1x128xi32>
    %7 = arith.sitofp %6 : vector<1x128xi32> to vector<1x128xf32>
    %c0 = arith.constant 0 : index
    %c0_1 = arith.constant 0 : index
    %c0_2 = arith.constant 0 : index
    %8 = vector.load %arg16[%c0, %c0_1, %c0_2] : memref<1x16x128xf32, #tpu.memory_space<vmem>>, vector<1x16x128xf32>
    %9 = vector.shape_cast %8 : vector<1x16x128xf32> to vector<16x128xf32>
    %c0_3 = arith.constant 0 : index
    %c0_4 = arith.constant 0 : index
    %c0_5 = arith.constant 0 : index
    %10 = vector.load %arg4[%c0_3, %c0_4, %c0_5] : memref<1x1x128xf32, #tpu.memory_space<vmem>>, vector<1x1x128xf32>
    %11 = vector.shape_cast %10 : vector<1x1x128xf32> to vector<1x128xf32>
    %c0_6 = arith.constant 0 : index
    %c0_7 = arith.constant 0 : index
    %c0_8 = arith.constant 0 : index
    %12 = vector.load %arg5[%c0_6, %c0_7, %c0_8] : memref<1x1x128xf32, #tpu.memory_space<vmem>>, vector<1x1x128xf32>
    %13 = vector.shape_cast %12 : vector<1x1x128xf32> to vector<1x128xf32>
    %cst = arith.constant dense<0.000000e+00> : vector<16xf32>
    %14 = vector.multi_reduction <add>, %9, %cst [1] : vector<16x128xf32> to vector<16xf32>
    %15 = vector.shape_cast %14 : vector<16xf32> to vector<16x1xf32>
    %cst_9 = arith.constant 3.125000e-02 : f32
    %16 = vector.broadcast %cst_9 : f32 to vector<16x1xf32>
    %17 = arith.mulf %15, %16 : vector<16x1xf32>
    %18 = vector.broadcast %17 : vector<16x1xf32> to vector<16x128xf32>
    %19 = arith.subf %9, %18 : vector<16x128xf32>
    %20 = vector.broadcast %7 : vector<1x128xf32> to vector<16x128xf32>
    %21 = arith.mulf %19, %20 : vector<16x128xf32>
    %22 = arith.mulf %21, %21 : vector<16x128xf32>
    %cst_10 = arith.constant dense<0.000000e+00> : vector<16xf32>
    %23 = vector.multi_reduction <add>, %22, %cst_10 [1] : vector<16x128xf32> to vector<16xf32>
    %24 = vector.shape_cast %23 : vector<16xf32> to vector<16x1xf32>
    %cst_11 = arith.constant 0.0322580636 : f32
    %25 = vector.broadcast %cst_11 : f32 to vector<16x1xf32>
    %26 = arith.mulf %24, %25 : vector<16x1xf32>
    %27 = math.sqrt %26 : vector<16x1xf32>
    %cst_12 = arith.constant 9.99999997E-7 : f32
    %28 = vector.broadcast %cst_12 : f32 to vector<16x1xf32>
    %29 = arith.addf %27, %28 : vector<16x1xf32>
    %cst_13 = arith.constant 1.000000e+00 : f32
    %30 = vector.broadcast %cst_13 : f32 to vector<16x1xf32>
    %31 = arith.divf %30, %29 : vector<16x1xf32>
    %32 = vector.broadcast %31 : vector<16x1xf32> to vector<16x128xf32>
    %33 = arith.mulf %21, %32 : vector<16x128xf32>
    %34 = vector.broadcast %11 : vector<1x128xf32> to vector<16x128xf32>
    %35 = arith.mulf %34, %33 : vector<16x128xf32>
    %36 = vector.broadcast %13 : vector<1x128xf32> to vector<16x128xf32>
    %37 = arith.addf %35, %36 : vector<16x128xf32>
    %38 = arith.truncf %37 : vector<16x128xf32> to vector<16x128xbf16>
    %c0_14 = arith.constant 0 : index
    %c0_15 = arith.constant 0 : index
    %c0_16 = arith.constant 0 : index
    %39 = vector.load %arg6[%c0_14, %c0_15, %c0_16] : memref<1x128x768xbf16, #tpu.memory_space<vmem>>, vector<1x128x768xbf16>
    %40 = vector.shape_cast %39 : vector<1x128x768xbf16> to vector<128x768xbf16>
    %cst_17 = arith.constant dense<0.000000e+00> : vector<16x768xf32>
    %41 = tpu.matmul %38, %40, %cst_17 {dimension_numbers = #tpu.dot_dimension_numbers<[1], [0], [0], [1], [0, 0, 1, 1], [], []>} : vector<16x128xbf16>, vector<128x768xbf16>, vector<16x768xf32> -> vector<16x768xf32>
    %c0_18 = arith.constant 0 : index
    %c0_19 = arith.constant 0 : index
    %c0_20 = arith.constant 0 : index
    %42 = vector.load %arg7[%c0_18, %c0_19, %c0_20] : memref<1x1x768xf32, #tpu.memory_space<vmem>>, vector<1x1x768xf32>
    %43 = vector.shape_cast %42 : vector<1x1x768xf32> to vector<1x768xf32>
    %44 = vector.broadcast %43 : vector<1x768xf32> to vector<16x768xf32>
    %45 = arith.addf %41, %44 : vector<16x768xf32>
    %c0_21 = arith.constant 0 : index
    %c0_22 = arith.constant 0 : index
    %c0_23 = arith.constant 0 : index
    %46 = vector.load %arg3[%c0_21, %c0_22, %c0_23] : memref<1x1x16xf32, #tpu.memory_space<vmem>>, vector<1x1x16xf32>
    %47 = vector.shape_cast %46 : vector<1x1x16xf32> to vector<1x16xf32>
    %48 = vector.extract_strided_slice %45 {offsets = [0, 0], sizes = [16, 128], strides = [1, 1]} : vector<16x768xf32> to vector<16x128xf32>
    %49 = vector.extract_strided_slice %45 {offsets = [0, 256], sizes = [16, 128], strides = [1, 1]} : vector<16x768xf32> to vector<16x128xf32>
    %50 = vector.extract_strided_slice %45 {offsets = [0, 512], sizes = [16, 128], strides = [1, 1]} : vector<16x768xf32> to vector<16x128xf32>
    %51 = arith.truncf %48 : vector<16x128xf32> to vector<16x128xbf16>
    %52 = arith.truncf %49 : vector<16x128xf32> to vector<16x128xbf16>
    %cst_24 = arith.constant dense<0.000000e+00> : vector<16x16xf32>
    %53 = tpu.matmul %51, %52, %cst_24 {dimension_numbers = #tpu.dot_dimension_numbers<[1], [1], [0], [0], [0, 0, 1, 0], [], []>} : vector<16x128xbf16>, vector<16x128xbf16>, vector<16x16xf32> -> vector<16x16xf32>
    %54 = vector.broadcast %47 : vector<1x16xf32> to vector<16x16xf32>
    %55 = arith.addf %53, %54 : vector<16x16xf32>
    %cst_25 = arith.constant dense<0xFF800000> : vector<16xf32>
    %56 = vector.multi_reduction <maximumf>, %55, %cst_25 [1] : vector<16x16xf32> to vector<16xf32>
    %57 = vector.shape_cast %56 : vector<16xf32> to vector<16x1xf32>
    %58 = vector.broadcast %57 : vector<16x1xf32> to vector<16x16xf32>
    %59 = arith.subf %55, %58 : vector<16x16xf32>
    %60 = math.exp %59 : vector<16x16xf32>
    %cst_26 = arith.constant dense<0.000000e+00> : vector<16xf32>
    %61 = vector.multi_reduction <add>, %60, %cst_26 [1] : vector<16x16xf32> to vector<16xf32>
    %62 = vector.shape_cast %61 : vector<16xf32> to vector<16x1xf32>
    %63 = tpu.reciprocal %62 {approx = true} : vector<16x1xf32> -> vector<16x1xf32>
    %64 = vector.broadcast %63 : vector<16x1xf32> to vector<16x16xf32>
    %65 = arith.mulf %60, %64 : vector<16x16xf32>
    %66 = arith.truncf %65 : vector<16x16xf32> to vector<16x16xbf16>
    %67 = arith.truncf %50 : vector<16x128xf32> to vector<16x128xbf16>
    %cst_27 = arith.constant dense<0.000000e+00> : vector<16x128xf32>
    %68 = tpu.matmul %66, %67, %cst_27 {dimension_numbers = #tpu.dot_dimension_numbers<[1], [0], [0], [1], [0, 0, 1, 1], [], []>} : vector<16x16xbf16>, vector<16x128xbf16>, vector<16x128xf32> -> vector<16x128xf32>
    %69 = arith.truncf %68 : vector<16x128xf32> to vector<16x128xbf16>
    %c0_28 = arith.constant 0 : index
    %c0_29 = arith.constant 0 : index
    %70 = vector.load %arg17[%c0_28, %c0_29] : memref<16x256xbf16, #tpu.memory_space<vmem>>, vector<16x128xbf16>
    tpu.vector_store %arg17[%c0_28, %c0_29], %69 {strides = array<i32>} : memref<16x256xbf16, #tpu.memory_space<vmem>>, vector<16x128xbf16>,
    %71 = vector.extract_strided_slice %45 {offsets = [0, 128], sizes = [16, 128], strides = [1, 1]} : vector<16x768xf32> to vector<16x128xf32>
    %72 = vector.extract_strided_slice %45 {offsets = [0, 384], sizes = [16, 128], strides = [1, 1]} : vector<16x768xf32> to vector<16x128xf32>
    %73 = vector.extract_strided_slice %45 {offsets = [0, 640], sizes = [16, 128], strides = [1, 1]} : vector<16x768xf32> to vector<16x128xf32>
    %74 = arith.truncf %71 : vector<16x128xf32> to vector<16x128xbf16>
    %75 = arith.truncf %72 : vector<16x128xf32> to vector<16x128xbf16>
    %cst_30 = arith.constant dense<0.000000e+00> : vector<16x16xf32>
    %76 = tpu.matmul %74, %75, %cst_30 {dimension_numbers = #tpu.dot_dimension_numbers<[1], [1], [0], [0], [0, 0, 1, 0], [], []>} : vector<16x128xbf16>, vector<16x128xbf16>, vector<16x16xf32> -> vector<16x16xf32>
    %77 = vector.broadcast %47 : vector<1x16xf32> to vector<16x16xf32>
    %78 = arith.addf %76, %77 : vector<16x16xf32>
    %cst_31 = arith.constant dense<0xFF800000> : vector<16xf32>
    %79 = vector.multi_reduction <maximumf>, %78, %cst_31 [1] : vector<16x16xf32> to vector<16xf32>
    %80 = vector.shape_cast %79 : vector<16xf32> to vector<16x1xf32>
    %81 = vector.broadcast %80 : vector<16x1xf32> to vector<16x16xf32>
    %82 = arith.subf %78, %81 : vector<16x16xf32>
    %83 = math.exp %82 : vector<16x16xf32>
    %cst_32 = arith.constant dense<0.000000e+00> : vector<16xf32>
    %84 = vector.multi_reduction <add>, %83, %cst_32 [1] : vector<16x16xf32> to vector<16xf32>
    %85 = vector.shape_cast %84 : vector<16xf32> to vector<16x1xf32>
    %86 = tpu.reciprocal %85 {approx = true} : vector<16x1xf32> -> vector<16x1xf32>
    %87 = vector.broadcast %86 : vector<16x1xf32> to vector<16x16xf32>
    %88 = arith.mulf %83, %87 : vector<16x16xf32>
    %89 = arith.truncf %88 : vector<16x16xf32> to vector<16x16xbf16>
    %90 = arith.truncf %73 : vector<16x128xf32> to vector<16x128xbf16>
    %cst_33 = arith.constant dense<0.000000e+00> : vector<16x128xf32>
    %91 = tpu.matmul %89, %90, %cst_33 {dimension_numbers = #tpu.dot_dimension_numbers<[1], [0], [0], [1], [0, 0, 1, 1], [], []>} : vector<16x16xbf16>, vector<16x128xbf16>, vector<16x128xf32> -> vector<16x128xf32>
    %92 = arith.truncf %91 : vector<16x128xf32> to vector<16x128xbf16>
    %c0_34 = arith.constant 0 : index
    %c128 = arith.constant 128 : index
    %93 = vector.load %arg17[%c0_34, %c128] : memref<16x256xbf16, #tpu.memory_space<vmem>>, vector<16x128xbf16>
    tpu.vector_store %arg17[%c0_34, %c128], %92 {strides = array<i32>} : memref<16x256xbf16, #tpu.memory_space<vmem>>, vector<16x128xbf16>,
    %c0_35 = arith.constant 0 : index
    %c0_36 = arith.constant 0 : index
    %94 = vector.load %arg17[%c0_35, %c0_36] : memref<16x256xbf16, #tpu.memory_space<vmem>>, vector<16x256xbf16>
    %c0_37 = arith.constant 0 : index
    %c0_38 = arith.constant 0 : index
    %c0_39 = arith.constant 0 : index
    %95 = vector.load %arg8[%c0_37, %c0_38, %c0_39] : memref<1x256x128xbf16, #tpu.memory_space<vmem>>, vector<1x256x128xbf16>
    %96 = vector.shape_cast %95 : vector<1x256x128xbf16> to vector<256x128xbf16>
    %cst_40 = arith.constant dense<0.000000e+00> : vector<16x128xf32>
    %97 = tpu.matmul %94, %96, %cst_40 {dimension_numbers = #tpu.dot_dimension_numbers<[1], [0], [0], [1], [0, 0, 1, 1], [], []>} : vector<16x256xbf16>, vector<256x128xbf16>, vector<16x128xf32> -> vector<16x128xf32>
    %c0_41 = arith.constant 0 : index
    %c0_42 = arith.constant 0 : index
    %c0_43 = arith.constant 0 : index
    %98 = vector.load %arg9[%c0_41, %c0_42, %c0_43] : memref<1x1x128xf32, #tpu.memory_space<vmem>>, vector<1x1x128xf32>
    %99 = vector.shape_cast %98 : vector<1x1x128xf32> to vector<1x128xf32>
    %100 = vector.broadcast %99 : vector<1x128xf32> to vector<16x128xf32>
    %101 = arith.addf %97, %100 : vector<16x128xf32>
    %102 = arith.addf %9, %101 : vector<16x128xf32>
    %c0_44 = arith.constant 0 : index
    %c0_45 = arith.constant 0 : index
    %c0_46 = arith.constant 0 : index
    %103 = vector.load %arg10[%c0_44, %c0_45, %c0_46] : memref<1x1x128xf32, #tpu.memory_space<vmem>>, vector<1x1x128xf32>
    %104 = vector.shape_cast %103 : vector<1x1x128xf32> to vector<1x128xf32>
    %c0_47 = arith.constant 0 : index
    %c0_48 = arith.constant 0 : index
    %c0_49 = arith.constant 0 : index
    %105 = vector.load %arg11[%c0_47, %c0_48, %c0_49] : memref<1x1x128xf32, #tpu.memory_space<vmem>>, vector<1x1x128xf32>
    %106 = vector.shape_cast %105 : vector<1x1x128xf32> to vector<1x128xf32>
    %cst_50 = arith.constant dense<0.000000e+00> : vector<16xf32>
    %107 = vector.multi_reduction <add>, %102, %cst_50 [1] : vector<16x128xf32> to vector<16xf32>
    %108 = vector.shape_cast %107 : vector<16xf32> to vector<16x1xf32>
    %cst_51 = arith.constant 3.125000e-02 : f32
    %109 = vector.broadcast %cst_51 : f32 to vector<16x1xf32>
    %110 = arith.mulf %108, %109 : vector<16x1xf32>
    %111 = vector.broadcast %110 : vector<16x1xf32> to vector<16x128xf32>
    %112 = arith.subf %102, %111 : vector<16x128xf32>
    %113 = vector.broadcast %7 : vector<1x128xf32> to vector<16x128xf32>
    %114 = arith.mulf %112, %113 : vector<16x128xf32>
    %115 = arith.mulf %114, %114 : vector<16x128xf32>
    %cst_52 = arith.constant dense<0.000000e+00> : vector<16xf32>
    %116 = vector.multi_reduction <add>, %115, %cst_52 [1] : vector<16x128xf32> to vector<16xf32>
    %117 = vector.shape_cast %116 : vector<16xf32> to vector<16x1xf32>
    %cst_53 = arith.constant 0.0322580636 : f32
    %118 = vector.broadcast %cst_53 : f32 to vector<16x1xf32>
    %119 = arith.mulf %117, %118 : vector<16x1xf32>
    %120 = math.sqrt %119 : vector<16x1xf32>
    %cst_54 = arith.constant 9.99999997E-7 : f32
    %121 = vector.broadcast %cst_54 : f32 to vector<16x1xf32>
    %122 = arith.addf %120, %121 : vector<16x1xf32>
    %cst_55 = arith.constant 1.000000e+00 : f32
    %123 = vector.broadcast %cst_55 : f32 to vector<16x1xf32>
    %124 = arith.divf %123, %122 : vector<16x1xf32>
    %125 = vector.broadcast %124 : vector<16x1xf32> to vector<16x128xf32>
    %126 = arith.mulf %114, %125 : vector<16x128xf32>
    %127 = vector.broadcast %104 : vector<1x128xf32> to vector<16x128xf32>
    %128 = arith.mulf %127, %126 : vector<16x128xf32>
    %129 = vector.broadcast %106 : vector<1x128xf32> to vector<16x128xf32>
    %130 = arith.addf %128, %129 : vector<16x128xf32>
    %131 = arith.truncf %130 : vector<16x128xf32> to vector<16x128xbf16>
    %c0_56 = arith.constant 0 : index
    %c0_57 = arith.constant 0 : index
    %c0_58 = arith.constant 0 : index
    %132 = vector.load %arg12[%c0_56, %c0_57, %c0_58] : memref<1x128x128xbf16, #tpu.memory_space<vmem>>, vector<1x128x128xbf16>
    %133 = vector.shape_cast %132 : vector<1x128x128xbf16> to vector<128x128xbf16>
    %cst_59 = arith.constant dense<0.000000e+00> : vector<16x128xf32>
    %134 = tpu.matmul %131, %133, %cst_59 {dimension_numbers = #tpu.dot_dimension_numbers<[1], [0], [0], [1], [0, 0, 1, 1], [], []>} : vector<16x128xbf16>, vector<128x128xbf16>, vector<16x128xf32> -> vector<16x128xf32>
    %c0_60 = arith.constant 0 : index
    %c0_61 = arith.constant 0 : index
    %c0_62 = arith.constant 0 : index
    %135 = vector.load %arg13[%c0_60, %c0_61, %c0_62] : memref<1x1x128xf32, #tpu.memory_space<vmem>>, vector<1x1x128xf32>
    %136 = vector.shape_cast %135 : vector<1x1x128xf32> to vector<1x128xf32>
    %137 = vector.broadcast %136 : vector<1x128xf32> to vector<16x128xf32>
    %138 = arith.addf %134, %137 : vector<16x128xf32>
    %cst_63 = arith.constant 5.000000e-01 : f32
    %139 = vector.broadcast %cst_63 : f32 to vector<16x128xf32>
    %140 = arith.mulf %139, %138 : vector<16x128xf32>
    %cst_64 = arith.constant 0.636619746 : f32
    %141 = math.sqrt %cst_64 : f32
    %cst_65 = arith.constant 4.471500e-02 : f32
    %142 = vector.broadcast %cst_65 : f32 to vector<16x128xf32>
    %143 = arith.mulf %142, %138 : vector<16x128xf32>
    %144 = arith.mulf %143, %138 : vector<16x128xf32>
    %145 = arith.mulf %144, %138 : vector<16x128xf32>
    %146 = arith.addf %138, %145 : vector<16x128xf32>
    %147 = vector.broadcast %141 : f32 to vector<16x128xf32>
    %148 = arith.mulf %147, %146 : vector<16x128xf32>
    %149 = math.tanh %148 : vector<16x128xf32>
    %cst_66 = arith.constant 1.000000e+00 : f32
    %150 = vector.broadcast %cst_66 : f32 to vector<16x128xf32>
    %151 = arith.addf %150, %149 : vector<16x128xf32>
    %152 = arith.mulf %140, %151 : vector<16x128xf32>
    %153 = arith.truncf %152 : vector<16x128xf32> to vector<16x128xbf16>
    %c0_67 = arith.constant 0 : index
    %c0_68 = arith.constant 0 : index
    %c0_69 = arith.constant 0 : index
    %154 = vector.load %arg14[%c0_67, %c0_68, %c0_69] : memref<1x128x128xbf16, #tpu.memory_space<vmem>>, vector<1x128x128xbf16>
    %155 = vector.shape_cast %154 : vector<1x128x128xbf16> to vector<128x128xbf16>
    %cst_70 = arith.constant dense<0.000000e+00> : vector<16x128xf32>
    %156 = tpu.matmul %153, %155, %cst_70 {dimension_numbers = #tpu.dot_dimension_numbers<[1], [0], [0], [1], [0, 0, 1, 1], [], []>} : vector<16x128xbf16>, vector<128x128xbf16>, vector<16x128xf32> -> vector<16x128xf32>
    %157 = arith.addf %102, %156 : vector<16x128xf32>
    %c0_71 = arith.constant 0 : index
    %c0_72 = arith.constant 0 : index
    %c0_73 = arith.constant 0 : index
    %158 = vector.load %arg15[%c0_71, %c0_72, %c0_73] : memref<1x1x128xf32, #tpu.memory_space<vmem>>, vector<1x1x128xf32>
    %159 = vector.shape_cast %158 : vector<1x1x128xf32> to vector<1x128xf32>
    %160 = vector.broadcast %159 : vector<1x128xf32> to vector<16x128xf32>
    %161 = arith.addf %157, %160 : vector<16x128xf32>
    %162 = vector.shape_cast %161 : vector<16x128xf32> to vector<1x16x128xf32>
    %c0_74 = arith.constant 0 : index
    %c0_75 = arith.constant 0 : index
    %c0_76 = arith.constant 0 : index
    %163 = vector.load %arg16[%c0_74, %c0_75, %c0_76] : memref<1x16x128xf32, #tpu.memory_space<vmem>>, vector<1x16x128xf32>
    tpu.vector_store %arg16[%c0_74, %c0_75, %c0_76], %162 {strides = array<i32>} : memref<1x16x128xf32, #tpu.memory_space<vmem>>, vector<1x16x128xf32>,
    return
  }
  func.func @transform_0(%arg0: i32, %arg1: i32) -> (i32, i32, i32) {
    %c0_i32 = arith.constant 0 : i32
    %c0_i32_0 = arith.constant 0 : i32
    %c0_i32_1 = arith.constant 0 : i32
    return %arg0, %c0_i32, %c0_i32_0 : i32, i32, i32
  }
  func.func @transform_1(%arg0: i32, %arg1: i32) -> (i32, i32, i32) {
    %c0_i32 = arith.constant 0 : i32
    %c0_i32_0 = arith.constant 0 : i32
    %c0_i32_1 = arith.constant 0 : i32
    return %arg0, %c0_i32, %c0_i32_0 : i32, i32, i32
  }
  func.func @transform_2(%arg0: i32, %arg1: i32) -> (i32, i32, i32) {
    %c0_i32 = arith.constant 0 : i32
    %c0_i32_0 = arith.constant 0 : i32
    %c0_i32_1 = arith.constant 0 : i32
    return %arg1, %c0_i32, %c0_i32_0 : i32, i32, i32
  }
  func.func @transform_3(%arg0: i32, %arg1: i32) -> (i32, i32, i32) {
    %c0_i32 = arith.constant 0 : i32
    %c0_i32_0 = arith.constant 0 : i32
    %c0_i32_1 = arith.constant 0 : i32
    return %arg1, %c0_i32, %c0_i32_0 : i32, i32, i32
  }
  func.func @transform_4(%arg0: i32, %arg1: i32) -> (i32, i32, i32) {
    %c0_i32 = arith.constant 0 : i32
    %c0_i32_0 = arith.constant 0 : i32
    %c0_i32_1 = arith.constant 0 : i32
    return %arg1, %c0_i32, %c0_i32_0 : i32, i32, i32
  }
  func.func @transform_5(%arg0: i32, %arg1: i32) -> (i32, i32, i32) {
    %c0_i32 = arith.constant 0 : i32
    %c0_i32_0 = arith.constant 0 : i32
    %c0_i32_1 = arith.constant 0 : i32
    return %arg1, %c0_i32, %c0_i32_0 : i32, i32, i32
  }
  func.func @transform_6(%arg0: i32, %arg1: i32) -> (i32, i32, i32) {
    %c0_i32 = arith.constant 0 : i32
    %c0_i32_0 = arith.constant 0 : i32
    %c0_i32_1 = arith.constant 0 : i32
    return %arg1, %c0_i32, %c0_i32_0 : i32, i32, i32
  }
  func.func @transform_7(%arg0: i32, %arg1: i32) -> (i32, i32, i32) {
    %c0_i32 = arith.constant 0 : i32
    %c0_i32_0 = arith.constant 0 : i32
    %c0_i32_1 = arith.constant 0 : i32
    return %arg1, %c0_i32, %c0_i32_0 : i32, i32, i32
  }
  func.func @transform_8(%arg0: i32, %arg1: i32) -> (i32, i32, i32) {
    %c0_i32 = arith.constant 0 : i32
    %c0_i32_0 = arith.constant 0 : i32
    %c0_i32_1 = arith.constant 0 : i32
    return %arg1, %c0_i32, %c0_i32_0 : i32, i32, i32
  }
  func.func @transform_9(%arg0: i32, %arg1: i32) -> (i32, i32, i32) {
    %c0_i32 = arith.constant 0 : i32
    %c0_i32_0 = arith.constant 0 : i32
    %c0_i32_1 = arith.constant 0 : i32
    return %arg1, %c0_i32, %c0_i32_0 : i32, i32, i32
  }
  func.func @transform_10(%arg0: i32, %arg1: i32) -> (i32, i32, i32) {
    %c0_i32 = arith.constant 0 : i32
    %c0_i32_0 = arith.constant 0 : i32
    %c0_i32_1 = arith.constant 0 : i32
    return %arg1, %c0_i32, %c0_i32_0 : i32, i32, i32
  }
  func.func @transform_11(%arg0: i32, %arg1: i32) -> (i32, i32, i32) {
    %c0_i32 = arith.constant 0 : i32
    %c0_i32_0 = arith.constant 0 : i32
    %c0_i32_1 = arith.constant 0 : i32
    return %arg1, %c0_i32, %c0_i32_0 : i32, i32, i32
  }
  func.func @transform_12(%arg0: i32, %arg1: i32) -> (i32, i32, i32) {
    %c0_i32 = arith.constant 0 : i32
    %c0_i32_0 = arith.constant 0 : i32
    %c0_i32_1 = arith.constant 0 : i32
    return %arg1, %c0_i32, %c0_i32_0 : i32, i32, i32
  }
  func.func @transform_13(%arg0: i32, %arg1: i32) -> (i32, i32, i32) {
    %c0_i32 = arith.constant 0 : i32
    %c0_i32_0 = arith.constant 0 : i32
    %c0_i32_1 = arith.constant 0 : i32
    return %arg1, %c0_i32, %c0_i32_0 : i32, i32, i32
  }
  func.func @transform_14(%arg0: i32, %arg1: i32) -> (i32, i32, i32) {
    %c0_i32 = arith.constant 0 : i32
    %c0_i32_0 = arith.constant 0 : i32
    %c0_i32_1 = arith.constant 0 : i32
    return %arg0, %c0_i32, %c0_i32_0 : i32, i32, i32
  }
}

</mosaic_0001>

<llo_original>
// kernel: bert4rec_forward.3
$region0: #{bert4rec_forward.3}
  #allocation0 [shape = 'u32[]', space=smem, size = 0x4, offset = 0x4, fixed_abs, tag = 'smem constant byte address 0x4 - core index']
  #allocation1 [shape = 'u32[144,128]{1,0:T(1,128)}', space=vmem, size = 0x12000, scoped, tag = 'internal scratch']
  %s0 = inlined_call_operand.vmem [shape: f32[32,128], index: 0, kind: input, shape index: {}]
  %s1 = inlined_call_operand.vmem [shape: bf16[128,128], index: 1, kind: input, shape index: {}]
  %s2 = inlined_call_operand.vmem [shape: f32[1,128], index: 2, kind: input, shape index: {}]
  %s3 = inlined_call_operand.hbm [shape: f32[32,128], index: 3, kind: output, shape index: {}]
  %s4 = sld [smem:[#allocation0]]
  $region22: #{bert4rec_forward.3} parent=0
    _
  %s6 = ssub.s32 1, %s4
  %s7 = scalar_select 0, %s6, %s4
  $region1: #{bert4rec_forward.3} parent=0
    #allocation2 [shape = 'u8[16384]{0}', space=vmem, size = 0x4000, scoped, tag = 'output window, operand 0, single buffered']
    #allocation3 [shape = 's32[1]{0}', space=sflag, size = 0x4, scoped, tag = 'scoped memory for bert4rec_forward.3']
    %8 = vsyncpa [#allocation3], 0
    // Predicated region
    $region2: #{bert4rec_forward.3} parent=1 // pred_check
      _
    $region3: #{bert4rec_forward.3} parent=1 // pred_check_branch
      %10 = sbr.rel (0) target = $region5
    $region4: #{bert4rec_forward.3} parent=1 // pred_region
      _
    $region5: #{bert4rec_forward.3} parent=1 // pred_fallthru
      _
    // Predicated region
    $region6: #{bert4rec_forward.3} parent=1 // pred_check
      _
    $region7: #{bert4rec_forward.3} parent=1 // pred_check_branch
      %12 = sbr.rel (0) target = $region9
    $region8: #{bert4rec_forward.3} parent=1 // pred_region
      _
    $region9: #{bert4rec_forward.3} parent=1 // pred_fallthru
      _
    // Predicated region
    $region10: #{bert4rec_forward.3} parent=1 // pred_check
      _
    $region11: #{bert4rec_forward.3} parent=1 // pred_check_branch
      %14 = sbr.rel (0) target = $region13
    $region12: #{bert4rec_forward.3} parent=1 // pred_region
      _
    $region13: #{bert4rec_forward.3} parent=1 // pred_fallthru
      _
    %v16 = vld [vmem:[%s0] sm:$0xff]
    %v17 = vld [vmem:[%s0 + $0x8] sm:$0xff]
    %v18 = vld [vmem:[%s0 + $0x10] sm:$0xff]
    %v19 = vld [vmem:[%s0 + $0x18] sm:$0xff]
    %v20 = vpack.c.bf16 %v17, %v16
    %v21 = vpack.c.bf16 %v19, %v18
    %v22 = vld [vmem:[%s1] sm:$0xf]
    %v23 = vld [vmem:[%s1 + $0x4] sm:$0xf]
    %v24 = vld [vmem:[%s1 + $0x8] sm:$0xf]
    %v25 = vld [vmem:[%s1 + $0xc] sm:$0xf]
    %v26 = vld [vmem:[%s1 + $0x10] sm:$0xf]
    %v27 = vld [vmem:[%s1 + $0x14] sm:$0xf]
    %v28 = vld [vmem:[%s1 + $0x18] sm:$0xf]
    %v29 = vld [vmem:[%s1 + $0x1c] sm:$0xf]
    %v30 = vld [vmem:[%s1 + $0x20] sm:$0xf]
    %v31 = vld [vmem:[%s1 + $0x24] sm:$0xf]
    %v32 = vld [vmem:[%s1 + $0x28] sm:$0xf]
    %v33 = vld [vmem:[%s1 + $0x2c] sm:$0xf]
    %v34 = vld [vmem:[%s1 + $0x30] sm:$0xf]
    %v35 = vld [vmem:[%s1 + $0x34] sm:$0xf]
    %v36 = vld [vmem:[%s1 + $0x38] sm:$0xf]
    %v37 = vld [vmem:[%s1 + $0x3c] sm:$0xf]
    %v38 = vld [vmem:[%s2] sm:$0x1]
    %v40 = vlaneseq
    %v41 = vshrl.u32 %v40, 7
    %v42 = vsub.s32 0, %v41
    %v43 = vrot.slane %v38, %v42
    %v61 = vunpack.c.l.b16 %v22
    %v62 = vunpack.c.l.b16 %v23
    %v63 = vunpack.c.l.b16 %v24
    %v64 = vunpack.c.l.b16 %v25
    %v65 = vunpack.c.l.b16 %v26
    %v66 = vunpack.c.l.b16 %v27
    %v67 = vunpack.c.l.b16 %v28
    %v68 = vunpack.c.l.b16 %v29
    %v69 = vunpack.c.l.b16 %v30
    %v70 = vunpack.c.l.b16 %v31
    %v71 = vunpack.c.l.b16 %v32
    %v72 = vunpack.c.l.b16 %v33
    %v73 = vunpack.c.l.b16 %v34
    %v74 = vunpack.c.l.b16 %v35
    %v75 = vunpack.c.l.b16 %v36
    %v76 = vunpack.c.l.b16 %v37
    %v77 = vpack.c.b16 %v62, %v61
    %v78 = vpack.c.b16 %v64, %v63
    %v79 = vpack.c.b16 %v66, %v65
    %v80 = vpack.c.b16 %v68, %v67
    %v81 = vpack.c.b16 %v70, %v69
    %v82 = vpack.c.b16 %v72, %v71
    %v83 = vpack.c.b16 %v74, %v73
    %v84 = vpack.c.b16 %v76, %v75
    %93 = vmatprep.subr.bf16.mxu0 0
    %94 = vmatpush1.bf16.msra.mxu0 %v84
    %95 = vmatprep.subr.bf16.mxu0 0
    %96 = vmatpush1.bf16.msra.mxu0 %v83
    %97 = vmatprep.subr.bf16.mxu0 0
    %98 = vmatpush1.bf16.msra.mxu0 %v82
    %99 = vmatprep.subr.bf16.mxu0 0
    %100 = vmatpush1.bf16.msra.mxu0 %v81
    %101 = vmatprep.subr.bf16.mxu0 0
    %102 = vmatpush1.bf16.msra.mxu0 %v80
    %103 = vmatprep.subr.bf16.mxu0 0
    %104 = vmatpush1.bf16.msra.mxu0 %v79
    %105 = vmatprep.subr.bf16.mxu0 0
    %106 = vmatpush1.bf16.msra.mxu0 %v78
    %107 = vmatprep.subr.bf16.mxu0 0
    %108 = vmatpush1.bf16.msra.mxu0 %v77
    %109 = vmatprep.subr.bf16.mxu0 0
    %110 = vmatpush2.bf16.msra.mxu0 0
    %111 = vmatprep.subr.bf16.mxu0 0
    %112 = vmatpush2.bf16.msra.mxu0 0
    %113 = vmatprep.subr.bf16.mxu0 0
    %114 = vmatpush2.bf16.msra.mxu0 0
    %115 = vmatprep.subr.bf16.mxu0 0
    %116 = vmatpush2.bf16.msra.mxu0 0
    %117 = vmatprep.subr.bf16.mxu0 0
    %118 = vmatpush2.bf16.msra.mxu0 0
    %119 = vmatprep.subr.bf16.mxu0 0
    %120 = vmatpush2.bf16.msra.mxu0 0
    %121 = vmatprep.subr.bf16.mxu0 0
    %122 = vmatpush2.bf16.msra.mxu0 0
    %123 = vmatprep.subr.bf16.mxu0 0
    %124 = vmatpush2.bf16.msra.mxu0 0
    %125 = vmatprep.mubr.bf16.mxu0 0
    %126 = vmatmul.mubr.bf16.gmra.mxu0 %v20
    %v127 = vpop.f32.mrf.mxu0
    %v128 = vadd.f32 %v43, %v127
    %v129 = vpop.f32.mrf.mxu0
    %v130 = vpop.f32.mrf.mxu0
    %v131 = vadd.f32 %v43, %v130
    %v132 = vpop.f32.mrf.mxu0
    %133 = vmatprep.mubr.bf16.mxu0 0
    %134 = vmatmul.mubr.bf16.gmra.mxu0 %v21
    %v135 = vpop.f32.mrf.mxu0
    %v136 = vadd.f32 %v43, %v135
    %v137 = vpop.f32.mrf.mxu0
    %v138 = vpop.f32.mrf.mxu0
    %v139 = vadd.f32 %v43, %v138
    %v140 = vpop.f32.mrf.mxu0
    %141 = vdwg.mxu0
    %142 = vst [vmem:[#allocation2] sm:$0xff] %v128
    %143 = vst [vmem:[#allocation2 + $0x8] sm:$0xff] %v131
    %144 = vst [vmem:[#allocation2 + $0x10] sm:$0xff] %v136
    %145 = vst [vmem:[#allocation2 + $0x18] sm:$0xff] %v139
    // Predicated region
    $region14: #{bert4rec_forward.3} parent=1 // pred_check
      _
    $region15: #{bert4rec_forward.3} parent=1 // pred_check_branch
      %147 = sbr.rel (0) target = $region17
    $region16: #{bert4rec_forward.3} parent=1 // pred_region
      %s149 = ssub.s32 512, 512
      %150 = vsyncadd [#allocation3], %s149
      %s151 = sshll.u32 [#allocation2], 4
      %s152 = int_to_ptr.vmem [resolvable:$true] %s151
      %157 = dma.vmem_to_hbm [thread:$0]  %s152, 512, %s3, [#allocation3], 128, 128, 8
    $region17: #{bert4rec_forward.3} parent=1 // pred_fallthru
      _
    // Predicated region
    $region18: #{bert4rec_forward.3} parent=1 // pred_check
      _
    $region19: #{bert4rec_forward.3} parent=1 // pred_check_branch
      %159 = sbr.rel (0) target = $region21
    $region20: #{bert4rec_forward.3} parent=1 // pred_region
      %160 = dma.done [#allocation3], 512
    $region21: #{bert4rec_forward.3} parent=1 // pred_fallthru
      _
    %161 = vsyncpa [#allocation3], 1

// kernel: bert4rec_forward.2
$region0: #{bert4rec_forward.2}
  #allocation0 [shape = 'u32[]', space=smem, size = 0x4, offset = 0x4, fixed_abs, tag = 'smem constant byte address 0x4 - core index']
  #allocation1 [shape = 'u32[144,128]{1,0:T(1,128)}', space=vmem, size = 0x12000, scoped, tag = 'internal scratch']
  #allocation2 [shape = 'bf16[16,256]{1,0:T(8,128)(2,1)}', space=vmem, size = 0x2000, scoped, tag = 'scratch operand']
  %s0 = inlined_call_operand.vmem [shape: f32[2,16,128], index: 0, kind: input, shape index: {}, may-alias: {0,14}]
  %s1 = inlined_call_operand.vmem [shape: f32[2,1,16], index: 1, kind: input, shape index: {}]
  %s2 = inlined_call_operand.vmem [shape: f32[2,1,128], index: 2, kind: input, shape index: {}]
  %s3 = inlined_call_operand.vmem [shape: f32[2,1,128], index: 3, kind: input, shape index: {}]
  %s4 = inlined_call_operand.hbm [shape: bf16[2,128,768], index: 4, kind: input, shape index: {}]
  %s5 = inlined_call_operand.vmem [shape: f32[2,1,768], index: 5, kind: input, shape index: {}]
  %s6 = inlined_call_operand.vmem [shape: bf16[2,256,128], index: 6, kind: input, shape index: {}]
  %s7 = inlined_call_operand.vmem [shape: f32[2,1,128], index: 7, kind: input, shape index: {}]
  %s8 = inlined_call_operand.hbm [shape: f32[2,1,128], index: 8, kind: input, shape index: {}]
  %s9 = inlined_call_operand.hbm [shape: f32[2,1,128], index: 9, kind: input, shape index: {}]
  %s10 = inlined_call_operand.vmem [shape: bf16[2,128,128], index: 10, kind: input, shape index: {}]
  %s11 = inlined_call_operand.hbm [shape: f32[2,1,128], index: 11, kind: input, shape index: {}]
  %s12 = inlined_call_operand.hbm [shape: bf16[2,128,128], index: 12, kind: input, shape index: {}]
  %s13 = inlined_call_operand.hbm [shape: f32[2,1,128], index: 13, kind: input, shape index: {}]
  %s14 = inlined_call_operand.vmem [shape: f32[2,16,128], index: 14, kind: output, shape index: {}, may-alias: {0,14}]
  %s15 = sld [smem:[#allocation0]]
  $region117: #{bert4rec_forward.2} parent=0
    _
  %s17 = ssub.s32 1, %s15
  %s18 = scalar_select 0, %s17, %s15
  $region1: #{bert4rec_forward.2} parent=0
    #allocation3 [shape = 'u8[393216]{0}', space=vmem, size = 0x60000, scoped, tag = 'input window, operand 4']
    #allocation4 [shape = 's32[2]{0}', space=sflag, size = 0x8, scoped, tag = 'scoped memory for bert4rec_forward.2']
    #allocation5 [shape = 'u8[1024]{0}', space=vmem, size = 0x400, scoped, tag = 'input window, operand 8']
    #allocation6 [shape = 's32[2]{0}', space=sflag, size = 0x8, scoped, tag = 'scoped memory for bert4rec_forward.2']
    #allocation7 [shape = 'u8[1024]{0}', space=vmem, size = 0x400, scoped, tag = 'input window, operand 9']
    #allocation8 [shape = 'u8[1024]{0}', space=vmem, size = 0x400, scoped, tag = 'input window, operand 11']
    #allocation9 [shape = 's32[2]{0}', space=sflag, size = 0x8, scoped, tag = 'scoped memory for bert4rec_forward.2']
    #allocation10 [shape = 'u8[65536]{0}', space=vmem, size = 0x10000, scoped, tag = 'input window, operand 12']
    #allocation11 [shape = 'u8[1024]{0}', space=vmem, size = 0x400, scoped, tag = 'input window, operand 13']
    #allocation12 [shape = 's32[2]{0}', space=sflag, size = 0x8, scoped, tag = 'scoped memory for bert4rec_forward.2']
    %19 = vsyncpa [#allocation4], 0
    %s20 = scalar_lea.sflag [#allocation4], 1
    %21 = vsyncpa %s20, 0
    %22 = vsyncpa [#allocation6], 0
    %s23 = scalar_lea.sflag [#allocation6], 1
    %24 = vsyncpa %s23, 0
    %25 = vsyncpa [#allocation9], 0
    %s26 = scalar_lea.sflag [#allocation9], 1
    %27 = vsyncpa %s26, 0
    %28 = vsyncpa [#allocation12], 0
    %s29 = scalar_lea.sflag [#allocation12], 1
    %30 = vsyncpa %s29, 0
    loop: start=0, step=1, limit=6
    $region2: #{bert4rec_forward.2} parent=1 // loop_pre_header
      _
    $region3: #{bert4rec_forward.2} parent=1 // loop_header
      %s32 = sphi 0, %s36
      %p33 = scmp.ge.s32.totalorder %s32, 6
      %s39 = sphi 0, %s51
      %s40 = sphi 0, %s47
      %s41 = sphi 0, %s39
      %s42 = sphi 0, %s40
      %s43 = sphi 0, %s41
      %s44 = sphi 0, %s42
      %s54 = sphi 0, %s56
      %s57 = sphi 0, %s54
      %s58 = sphi 0, %s57
      %s74 = sphi 0, %s58
      %s80 = sphi 0, %s82
      %s83 = sphi 0, %s80
      %s84 = sphi 0, %s83
      %s100 = sphi 0, %s84
      %s106 = sphi 0, %s108
      %s109 = sphi 0, %s106
      %s110 = sphi 0, %s109
      %s126 = sphi 0, %s110
      %s132 = sphi 0, %s134
      %s135 = sphi 0, %s132
      %s136 = sphi 0, %s135
      %s152 = sphi 0, %s136
      %s158 = sphi 0, %s160
      %s161 = sphi 0, %s158
      %s162 = sphi 0, %s161
      %s178 = sphi 0, %s162
      %s184 = sphi 0, %s186
      %s187 = sphi 0, %s184
      %s188 = sphi 0, %s187
      %s204 = sphi 0, %s188
      %s210 = sphi 0, %s212
      %s213 = sphi 0, %s210
      %s214 = sphi 0, %s213
      %s230 = sphi 0, %s214
      %s236 = sphi 0, %s238
      %s239 = sphi 0, %s236
      %s240 = sphi 0, %s239
      %s256 = sphi 0, %s240
      %s262 = sphi 0, %s264
      %s265 = sphi 0, %s262
      %s266 = sphi 0, %s265
      %s282 = sphi 0, %s266
      %s288 = sphi 0, %s290
      %s291 = sphi 0, %s288
      %s292 = sphi 0, %s291
      %s308 = sphi 0, %s292
      %s314 = sphi 0, %s316
      %s317 = sphi 0, %s314
      %s318 = sphi 0, %s317
      %s334 = sphi 0, %s318
      %s340 = sphi 0, %s342
      %s343 = sphi 0, %s340
      %s344 = sphi 0, %s343
      %s360 = sphi 0, %s344
      %s366 = sphi 0, %s368
      %s369 = sphi 0, %s366
      %s370 = sphi 0, %s369
      %s386 = sphi 0, %s370
      %s392 = sphi 0, %s394
      %s395 = sphi 0, %s392
      %s396 = sphi 0, %s395
      %s412 = sphi 0, %s396
      %s418 = sphi 0, %s420
      %s421 = sphi 0, %s418
      %s422 = sphi 0, %s421
      %s438 = sphi 0, %s422
    $region4: #{bert4rec_forward.2} parent=1 // loop_header_branch
      %35 = sbr.rel (%p33) target = $region8
    $region5: #{bert4rec_forward.2} parent=1 // loop_body
      %s37 = ssub.s32 %s32, 1
      %s38 = ssub.s32 %s32, 2
      %s45 = sadd.s32 1, %s40
      %p46 = scmp.ge.s32.totalorder %s45, 2
      %s47 = scalar_select %p46, 0, %s45
      %s48 = sadd.s32 1, %s39
      %s49 = scalar_select %p46, %s48, %s39
      %p50 = scmp.ge.s32.totalorder %s49, 2
      %s51 = scalar_select %p50, 0, %s49
      %s52 = ssub.s32 %s39, %s51
      %p53 = scmp.eq.s32.totalorder %s52, 0
      %s55 = sadd.s32 %s54, 1
      %s56 = scalar_select %p53, %s54, %s55
      %p59 = pneg %p53
      %p60 = scmp.eq.s32.totalorder %s32, 3
      %p61 = por %p59, %p60
      %p62 = scmp.ne.s32.totalorder %s54, %s57
      %p63 = scmp.eq.s32.totalorder %s32, 0
      %p64 = por %p62, %p63
      %p65 = scmp.ne.s32.totalorder %s54, %s57
      %p66 = scmp.eq.s32.totalorder %s37, 3
      %p67 = por %p65, %p66
      %p68 = scmp.ne.s32.totalorder %s57, %s58
      %p69 = scmp.eq.s32.totalorder %s37, 0
      %p70 = por %p68, %p69
      %p71 = scmp.ne.s32.totalorder %s57, %s58
      %p72 = scmp.eq.s32.totalorder %s38, 3
      %p73 = por %p71, %p72
      %p75 = scmp.ne.s32.totalorder %s58, %s74
      %p76 = scmp.eq.s32.totalorder %s38, 0
      %p77 = por %p75, %p76
      %s78 = ssub.s32 %s39, %s51
      %p79 = scmp.eq.s32.totalorder %s78, 0
      %s81 = sadd.s32 %s80, 1
      %s82 = scalar_select %p79, %s80, %s81
      %p85 = pneg %p79
      %p86 = scmp.eq.s32.totalorder %s32, 3
      %p87 = por %p85, %p86
      %p88 = scmp.ne.s32.totalorder %s80, %s83
      %p89 = scmp.eq.s32.totalorder %s32, 0
      %p90 = por %p88, %p89
      %p91 = scmp.ne.s32.totalorder %s80, %s83
      %p92 = scmp.eq.s32.totalorder %s37, 3
      %p93 = por %p91, %p92
      %p94 = scmp.ne.s32.totalorder %s83, %s84
      %p95 = scmp.eq.s32.totalorder %s37, 0
      %p96 = por %p94, %p95
      %p97 = scmp.ne.s32.totalorder %s83, %s84
      %p98 = scmp.eq.s32.totalorder %s38, 3
      %p99 = por %p97, %p98
      %p101 = scmp.ne.s32.totalorder %s84, %s100
      %p102 = scmp.eq.s32.totalorder %s38, 0
      %p103 = por %p101, %p102
      %s104 = ssub.s32 %s40, %s47
      %p105 = scmp.eq.s32.totalorder %s104, 0
      %s107 = sadd.s32 %s106, 1
      %s108 = scalar_select %p105, %s106, %s107
      %p111 = pneg %p105
      %p112 = scmp.eq.s32.totalorder %s32, 3
      %p113 = por %p111, %p112
      %p114 = scmp.ne.s32.totalorder %s106, %s109
      %p115 = scmp.eq.s32.totalorder %s32, 0
      %p116 = por %p114, %p115
      %p117 = scmp.ne.s32.totalorder %s106, %s109
      %p118 = scmp.eq.s32.totalorder %s37, 3
      %p119 = por %p117, %p118
      %p120 = scmp.ne.s32.totalorder %s109, %s110
      %p121 = scmp.eq.s32.totalorder %s37, 0
      %p122 = por %p120, %p121
      %p123 = scmp.ne.s32.totalorder %s109, %s110
      %p124 = scmp.eq.s32.totalorder %s38, 3
      %p125 = por %p123, %p124
      %p127 = scmp.ne.s32.totalorder %s110, %s126
      %p128 = scmp.eq.s32.totalorder %s38, 0
      %p129 = por %p127, %p128
      %s130 = ssub.s32 %s40, %s47
      %p131 = scmp.eq.s32.totalorder %s130, 0
      %s133 = sadd.s32 %s132, 1
      %s134 = scalar_select %p131, %s132, %s133
      %p137 = pneg %p131
      %p138 = scmp.eq.s32.totalorder %s32, 3
      %p139 = por %p137, %p138
      %p140 = scmp.ne.s32.totalorder %s132, %s135
      %p141 = scmp.eq.s32.totalorder %s32, 0
      %p142 = por %p140, %p141
      %p143 = scmp.ne.s32.totalorder %s132, %s135
      %p144 = scmp.eq.s32.totalorder %s37, 3
      %p145 = por %p143, %p144
      %p146 = scmp.ne.s32.totalorder %s135, %s136
      %p147 = scmp.eq.s32.totalorder %s37, 0
      %p148 = por %p146, %p147
      %p149 = scmp.ne.s32.totalorder %s135, %s136
      %p150 = scmp.eq.s32.totalorder %s38, 3
      %p151 = por %p149, %p150
      %p153 = scmp.ne.s32.totalorder %s136, %s152
      %p154 = scmp.eq.s32.totalorder %s38, 0
      %p155 = por %p153, %p154
      %s156 = ssub.s32 %s40, %s47
      %p157 = scmp.eq.s32.totalorder %s156, 0
      %s159 = sadd.s32 %s158, 1
      %s160 = scalar_select %p157, %s158, %s159
      %p163 = pneg %p157
      %p164 = scmp.eq.s32.totalorder %s32, 3
      %p165 = por %p163, %p164
      %p166 = scmp.ne.s32.totalorder %s158, %s161
      %p167 = scmp.eq.s32.totalorder %s32, 0
      %p168 = por %p166, %p167
      %p169 = scmp.ne.s32.totalorder %s158, %s161
      %p170 = scmp.eq.s32.totalorder %s37, 3
      %p171 = por %p169, %p170
      %p172 = scmp.ne.s32.totalorder %s161, %s162
      %p173 = scmp.eq.s32.totalorder %s37, 0
      %p174 = por %p172, %p173
      %p175 = scmp.ne.s32.totalorder %s161, %s162
      %p176 = scmp.eq.s32.totalorder %s38, 3
      %p177 = por %p175, %p176
      %p179 = scmp.ne.s32.totalorder %s162, %s178
      %p180 = scmp.eq.s32.totalorder %s38, 0
      %p181 = por %p179, %p180
      %s182 = ssub.s32 %s40, %s47
      %p183 = scmp.eq.s32.totalorder %s182, 0
      %s185 = sadd.s32 %s184, 1
      %s186 = scalar_select %p183, %s184, %s185
      %p189 = pneg %p183
      %p190 = scmp.eq.s32.totalorder %s32, 3
      %p191 = por %p189, %p190
      %p192 = scmp.ne.s32.totalorder %s184, %s187
      %p193 = scmp.eq.s32.totalorder %s32, 0
      %p194 = por %p192, %p193
      %p195 = scmp.ne.s32.totalorder %s184, %s187
      %p196 = scmp.eq.s32.totalorder %s37, 3
      %p197 = por %p195, %p196
      %p198 = scmp.ne.s32.totalorder %s187, %s188
      %p199 = scmp.eq.s32.totalorder %s37, 0
      %p200 = por %p198, %p199
      %p201 = scmp.ne.s32.totalorder %s187, %s188
      %p202 = scmp.eq.s32.totalorder %s38, 3
      %p203 = por %p201, %p202
      %p205 = scmp.ne.s32.totalorder %s188, %s204
      %p206 = scmp.eq.s32.totalorder %s38, 0
      %p207 = por %p205, %p206
      %s208 = ssub.s32 %s40, %s47
      %p209 = scmp.eq.s32.totalorder %s208, 0
      %s211 = sadd.s32 %s210, 1
      %s212 = scalar_select %p209, %s210, %s211
      %p215 = pneg %p209
      %p216 = scmp.eq.s32.totalorder %s32, 3
      %p217 = por %p215, %p216
      %p218 = scmp.ne.s32.totalorder %s210, %s213
      %p219 = scmp.eq.s32.totalorder %s32, 0
      %p220 = por %p218, %p219
      %p221 = scmp.ne.s32.totalorder %s210, %s213
      %p222 = scmp.eq.s32.totalorder %s37, 3
      %p223 = por %p221, %p222
      %p224 = scmp.ne.s32.totalorder %s213, %s214
      %p225 = scmp.eq.s32.totalorder %s37, 0
      %p226 = por %p224, %p225
      %p227 = scmp.ne.s32.totalorder %s213, %s214
      %p228 = scmp.eq.s32.totalorder %s38, 3
      %p229 = por %p227, %p228
      %p231 = scmp.ne.s32.totalorder %s214, %s230
      %p232 = scmp.eq.s32.totalorder %s38, 0
      %p233 = por %p231, %p232
      %s234 = ssub.s32 %s40, %s47
      %p235 = scmp.eq.s32.totalorder %s234, 0
      %s237 = sadd.s32 %s236, 1
      %s238 = scalar_select %p235, %s236, %s237
      %p241 = pneg %p235
      %p242 = scmp.eq.s32.totalorder %s32, 3
      %p243 = por %p241, %p242
      %p244 = scmp.ne.s32.totalorder %s236, %s239
      %p245 = scmp.eq.s32.totalorder %s32, 0
      %p246 = por %p244, %p245
      %p247 = scmp.ne.s32.totalorder %s236, %s239
      %p248 = scmp.eq.s32.totalorder %s37, 3
      %p249 = por %p247, %p248
      %p250 = scmp.ne.s32.totalorder %s239, %s240
      %p251 = scmp.eq.s32.totalorder %s37, 0
      %p252 = por %p250, %p251
      %p253 = scmp.ne.s32.totalorder %s239, %s240
      %p254 = scmp.eq.s32.totalorder %s38, 3
      %p255 = por %p253, %p254
      %p257 = scmp.ne.s32.totalorder %s240, %s256
      %p258 = scmp.eq.s32.totalorder %s38, 0
      %p259 = por %p257, %p258
      %s260 = ssub.s32 %s40, %s47
      %p261 = scmp.eq.s32.totalorder %s260, 0
      %s263 = sadd.s32 %s262, 1
      %s264 = scalar_select %p261, %s262, %s263
      %p267 = pneg %p261
      %p268 = scmp.eq.s32.totalorder %s32, 3
      %p269 = por %p267, %p268
      %p270 = scmp.ne.s32.totalorder %s262, %s265
      %p271 = scmp.eq.s32.totalorder %s32, 0
      %p272 = por %p270, %p271
      %p273 = scmp.ne.s32.totalorder %s262, %s265
      %p274 = scmp.eq.s32.totalorder %s37, 3
      %p275 = por %p273, %p274
      %p276 = scmp.ne.s32.totalorder %s265, %s266
      %p277 = scmp.eq.s32.totalorder %s37, 0
      %p278 = por %p276, %p277
      %p279 = scmp.ne.s32.totalorder %s265, %s266
      %p280 = scmp.eq.s32.totalorder %s38, 3
      %p281 = por %p279, %p280
      %p283 = scmp.ne.s32.totalorder %s266, %s282
      %p284 = scmp.eq.s32.totalorder %s38, 0
      %p285 = por %p283, %p284
      %s286 = ssub.s32 %s40, %s47
      %p287 = scmp.eq.s32.totalorder %s286, 0
      %s289 = sadd.s32 %s288, 1
      %s290 = scalar_select %p287, %s288, %s289
      %p293 = pneg %p287
      %p294 = scmp.eq.s32.totalorder %s32, 3
      %p295 = por %p293, %p294
      %p296 = scmp.ne.s32.totalorder %s288, %s291
      %p297 = scmp.eq.s32.totalorder %s32, 0
      %p298 = por %p296, %p297
      %p299 = scmp.ne.s32.totalorder %s288, %s291
      %p300 = scmp.eq.s32.totalorder %s37, 3
      %p301 = por %p299, %p300
      %p302 = scmp.ne.s32.totalorder %s291, %s292
      %p303 = scmp.eq.s32.totalorder %s37, 0
      %p304 = por %p302, %p303
      %p305 = scmp.ne.s32.totalorder %s291, %s292
      %p306 = scmp.eq.s32.totalorder %s38, 3
      %p307 = por %p305, %p306
      %p309 = scmp.ne.s32.totalorder %s292, %s308
      %p310 = scmp.eq.s32.totalorder %s38, 0
      %p311 = por %p309, %p310
      %s312 = ssub.s32 %s40, %s47
      %p313 = scmp.eq.s32.totalorder %s312, 0
      %s315 = sadd.s32 %s314, 1
      %s316 = scalar_select %p313, %s314, %s315
      %p319 = pneg %p313
      %p320 = scmp.eq.s32.totalorder %s32, 3
      %p321 = por %p319, %p320
      %p322 = scmp.ne.s32.totalorder %s314, %s317
      %p323 = scmp.eq.s32.totalorder %s32, 0
      %p324 = por %p322, %p323
      %p325 = scmp.ne.s32.totalorder %s314, %s317
      %p326 = scmp.eq.s32.totalorder %s37, 3
      %p327 = por %p325, %p326
      %p328 = scmp.ne.s32.totalorder %s317, %s318
      %p329 = scmp.eq.s32.totalorder %s37, 0
      %p330 = por %p328, %p329
      %p331 = scmp.ne.s32.totalorder %s317, %s318
      %p332 = scmp.eq.s32.totalorder %s38, 3
      %p333 = por %p331, %p332
      %p335 = scmp.ne.s32.totalorder %s318, %s334
      %p336 = scmp.eq.s32.totalorder %s38, 0
      %p337 = por %p335, %p336
      %s338 = ssub.s32 %s40, %s47
      %p339 = scmp.eq.s32.totalorder %s338, 0
      %s341 = sadd.s32 %s340, 1
      %s342 = scalar_select %p339, %s340, %s341
      %p345 = pneg %p339
      %p346 = scmp.eq.s32.totalorder %s32, 3
      %p347 = por %p345, %p346
      %p348 = scmp.ne.s32.totalorder %s340, %s343
      %p349 = scmp.eq.s32.totalorder %s32, 0
      %p350 = por %p348, %p349
      %p351 = scmp.ne.s32.totalorder %s340, %s343
      %p352 = scmp.eq.s32.totalorder %s37, 3
      %p353 = por %p351, %p352
      %p354 = scmp.ne.s32.totalorder %s343, %s344
      %p355 = scmp.eq.s32.totalorder %s37, 0
      %p356 = por %p354, %p355
      %p357 = scmp.ne.s32.totalorder %s343, %s344
      %p358 = scmp.eq.s32.totalorder %s38, 3
      %p359 = por %p357, %p358
      %p361 = scmp.ne.s32.totalorder %s344, %s360
      %p362 = scmp.eq.s32.totalorder %s38, 0
      %p363 = por %p361, %p362
      %s364 = ssub.s32 %s40, %s47
      %p365 = scmp.eq.s32.totalorder %s364, 0
      %s367 = sadd.s32 %s366, 1
      %s368 = scalar_select %p365, %s366, %s367
      %p371 = pneg %p365
      %p372 = scmp.eq.s32.totalorder %s32, 3
      %p373 = por %p371, %p372
      %p374 = scmp.ne.s32.totalorder %s366, %s369
      %p375 = scmp.eq.s32.totalorder %s32, 0
      %p376 = por %p374, %p375
      %p377 = scmp.ne.s32.totalorder %s366, %s369
      %p378 = scmp.eq.s32.totalorder %s37, 3
      %p379 = por %p377, %p378
      %p380 = scmp.ne.s32.totalorder %s369, %s370
      %p381 = scmp.eq.s32.totalorder %s37, 0
      %p382 = por %p380, %p381
      %p383 = scmp.ne.s32.totalorder %s369, %s370
      %p384 = scmp.eq.s32.totalorder %s38, 3
      %p385 = por %p383, %p384
      %p387 = scmp.ne.s32.totalorder %s370, %s386
      %p388 = scmp.eq.s32.totalorder %s38, 0
      %p389 = por %p387, %p388
      %s390 = ssub.s32 %s40, %s47
      %p391 = scmp.eq.s32.totalorder %s390, 0
      %s393 = sadd.s32 %s392, 1
      %s394 = scalar_select %p391, %s392, %s393
      %p397 = pneg %p391
      %p398 = scmp.eq.s32.totalorder %s32, 3
      %p399 = por %p397, %p398
      %p400 = scmp.ne.s32.totalorder %s392, %s395
      %p401 = scmp.eq.s32.totalorder %s32, 0
      %p402 = por %p400, %p401
      %p403 = scmp.ne.s32.totalorder %s392, %s395
      %p404 = scmp.eq.s32.totalorder %s37, 3
      %p405 = por %p403, %p404
      %p406 = scmp.ne.s32.totalorder %s395, %s396
      %p407 = scmp.eq.s32.totalorder %s37, 0
      %p408 = por %p406, %p407
      %p409 = scmp.ne.s32.totalorder %s395, %s396
      %p410 = scmp.eq.s32.totalorder %s38, 3
      %p411 = por %p409, %p410
      %p413 = scmp.ne.s32.totalorder %s396, %s412
      %p414 = scmp.eq.s32.totalorder %s38, 0
      %p415 = por %p413, %p414
      %s416 = ssub.s32 %s39, %s51
      %p417 = scmp.eq.s32.totalorder %s416, 0
      %s419 = sadd.s32 %s418, 1
      %s420 = scalar_select %p417, %s418, %s419
      %p423 = pneg %p417
      %p424 = scmp.eq.s32.totalorder %s32, 3
      %p425 = por %p423, %p424
      %p426 = scmp.ne.s32.totalorder %s418, %s421
      %p427 = scmp.eq.s32.totalorder %s32, 0
      %p428 = por %p426, %p427
      %p429 = scmp.ne.s32.totalorder %s418, %s421
      %p430 = scmp.eq.s32.totalorder %s37, 3
      %p431 = por %p429, %p430
      %p432 = scmp.ne.s32.totalorder %s421, %s422
      %p433 = scmp.eq.s32.totalorder %s37, 0
      %p434 = por %p432, %p433
      %p435 = scmp.ne.s32.totalorder %s421, %s422
      %p436 = scmp.eq.s32.totalorder %s38, 3
      %p437 = por %p435, %p436
      %p439 = scmp.ne.s32.totalorder %s422, %s438
      %p440 = scmp.eq.s32.totalorder %s38, 0
      %p441 = por %p439, %p440
      %p442 = scmp.le.s32.totalorder 1, %s32
      %p443 = scmp.lt.s32.totalorder %s32, 5
      %p444 = pnand %p442, %p443
      %p445 = pneg %p444
      // Predicated region
      $region9: #{bert4rec_forward.2} parent=5 // pred_check
        _
      $region10: #{bert4rec_forward.2} parent=5 // pred_check_branch
        %447 = sbr.rel (%p444) target = $region12
      $region11: #{bert4rec_forward.2} parent=5 // pred_region
        %s448 = ssub.s32 %s32, 1
      $region12: #{bert4rec_forward.2} parent=5 // pred_fallthru
        _
      %p449 = scmp.lt.s32.totalorder %s32, 4
      // Predicated region
      $region13: #{bert4rec_forward.2} parent=5 // pred_check
        %p450 = pneg %p449
      $region14: #{bert4rec_forward.2} parent=5 // pred_check_branch
        %452 = sbr.rel (%p450) target = $region16
      $region15: #{bert4rec_forward.2} parent=5 // pred_region
        // Predicated region
        $region17: #{bert4rec_forward.2} parent=15 // pred_check
          %p453 = pneg %p64
        $region18: #{bert4rec_forward.2} parent=15 // pred_check_branch
          %455 = sbr.rel (%p453) target = $region20
        $region19: #{bert4rec_forward.2} parent=15 // pred_region
          %p456 = scmp.lt.s32.totalorder %s39, 1
          %s457 = scalar_select %p456, %s39, 1
          %s458 = smul.addr %s457, 2
          %s459 = smul.addr %s458, 8
          %s460 = scalar_lea.vmem %s0, %s459
        $region20: #{bert4rec_forward.2} parent=15 // pred_fallthru
          _
        // Predicated region
        $region21: #{bert4rec_forward.2} parent=15 // pred_check
          %p461 = pneg %p90
        $region22: #{bert4rec_forward.2} parent=15 // pred_check_branch
          %463 = sbr.rel (%p461) target = $region24
        $region23: #{bert4rec_forward.2} parent=15 // pred_region
          %p464 = scmp.lt.s32.totalorder %s39, 1
          %s465 = scalar_select %p464, %s39, 1
          %s466 = scalar_lea.vmem %s1, %s465
        $region24: #{bert4rec_forward.2} parent=15 // pred_fallthru
          _
        // Predicated region
        $region25: #{bert4rec_forward.2} parent=15 // pred_check
          %p467 = pneg %p116
        $region26: #{bert4rec_forward.2} parent=15 // pred_check_branch
          %469 = sbr.rel (%p467) target = $region28
        $region27: #{bert4rec_forward.2} parent=15 // pred_region
          %p470 = scmp.lt.s32.totalorder %s40, 1
          %s471 = scalar_select %p470, %s40, 1
          %s472 = scalar_lea.vmem %s2, %s471
        $region28: #{bert4rec_forward.2} parent=15 // pred_fallthru
          _
        // Predicated region
        $region29: #{bert4rec_forward.2} parent=15 // pred_check
          %p473 = pneg %p142
        $region30: #{bert4rec_forward.2} parent=15 // pred_check_branch
          %475 = sbr.rel (%p473) target = $region32
        $region31: #{bert4rec_forward.2} parent=15 // pred_region
          %p476 = scmp.lt.s32.totalorder %s40, 1
          %s477 = scalar_select %p476, %s40, 1
          %s478 = scalar_lea.vmem %s3, %s477
        $region32: #{bert4rec_forward.2} parent=15 // pred_fallthru
          _
        // Predicated region
        $region33: #{bert4rec_forward.2} parent=15 // pred_check
          %p479 = pneg %p168
        $region34: #{bert4rec_forward.2} parent=15 // pred_check_branch
          %481 = sbr.rel (%p479) target = $region36
        $region35: #{bert4rec_forward.2} parent=15 // pred_region
          %s482 = sand.u32 %s158, 1
          %s483 = scalar_lea.sflag [#allocation4], %s482
          %s484 = sand.u32 %s158, 1
          %s485 = smul.addr %s484, 384
          %s486 = scalar_lea.vmem [#allocation3], %s485
          %s488 = ssub.s32 6144, 6144
          %489 = vsyncadd %s483, %s488
          %s490 = smul.addr %s40, 96
          %s491 = smul.addr %s490, 64
          %s492 = scalar_lea.hbm %s4, %s491
          %s493 = sshll.u32 %s486, 4
          %s494 = int_to_ptr.vmem [resolvable:$true] %s493
          %499 = dma.hbm_to_vmem [thread:$0]  %s492, 6144, %s494, %s483, 384, 384, 24
        $region36: #{bert4rec_forward.2} parent=15 // pred_fallthru
          _
        // Predicated region
        $region37: #{bert4rec_forward.2} parent=15 // pred_check
          %p500 = pneg %p194
        $region38: #{bert4rec_forward.2} parent=15 // pred_check_branch
          %502 = sbr.rel (%p500) target = $region40
        $region39: #{bert4rec_forward.2} parent=15 // pred_region
          %p503 = scmp.lt.s32.totalorder %s40, 1
          %s504 = scalar_select %p503, %s40, 1
          %s505 = smul.addr %s504, 6
          %s506 = scalar_lea.vmem %s5, %s505
        $region40: #{bert4rec_forward.2} parent=15 // pred_fallthru
          _
        // Predicated region
        $region41: #{bert4rec_forward.2} parent=15 // pred_check
          %p507 = pneg %p220
        $region42: #{bert4rec_forward.2} parent=15 // pred_check_branch
          %509 = sbr.rel (%p507) target = $region44
        $region43: #{bert4rec_forward.2} parent=15 // pred_region
          %p510 = scmp.lt.s32.totalorder %s40, 1
          %s511 = scalar_select %p510, %s40, 1
          %s512 = smul.addr %s511, 32
          %s513 = smul.addr %s512, 4
          %s514 = scalar_lea.vmem %s6, %s513
        $region44: #{bert4rec_forward.2} parent=15 // pred_fallthru
          _
        // Predicated region
        $region45: #{bert4rec_forward.2} parent=15 // pred_check
          %p515 = pneg %p246
        $region46: #{bert4rec_forward.2} parent=15 // pred_check_branch
          %517 = sbr.rel (%p515) target = $region48
        $region47: #{bert4rec_forward.2} parent=15 // pred_region
          %p518 = scmp.lt.s32.totalorder %s40, 1
          %s519 = scalar_select %p518, %s40, 1
          %s520 = scalar_lea.vmem %s7, %s519
        $region48: #{bert4rec_forward.2} parent=15 // pred_fallthru
          _
        // Predicated region
        $region49: #{bert4rec_forward.2} parent=15 // pred_check
          %p521 = pneg %p272
        $region50: #{bert4rec_forward.2} parent=15 // pred_check_branch
          %523 = sbr.rel (%p521) target = $region52
        $region51: #{bert4rec_forward.2} parent=15 // pred_region
          %s524 = sand.u32 %s32, 1
          %s525 = scalar_lea.sflag [#allocation6], %s524
          %s526 = sand.u32 %s262, 1
          %s527 = scalar_lea.vmem [#allocation5], %s526
          %s529 = ssub.s32 16, 16
          %530 = vsyncadd %s525, %s529
          %s531 = smul.addr %s40, 16
          %s532 = scalar_lea.hbm %s8, %s531
          %s534 = sshll.u32 %s527, 4
          %s535 = int_to_ptr.vmem [resolvable:$true] %s534
          %537 = dma.hbm_to_vmem [thread:$0]  %s532, 16, %s535, %s525
        $region52: #{bert4rec_forward.2} parent=15 // pred_fallthru
          _
        // Predicated region
        $region53: #{bert4rec_forward.2} parent=15 // pred_check
          %p538 = pneg %p298
        $region54: #{bert4rec_forward.2} parent=15 // pred_check_branch
          %540 = sbr.rel (%p538) target = $region56
        $region55: #{bert4rec_forward.2} parent=15 // pred_region
          %s541 = sand.u32 %s32, 1
          %s542 = scalar_lea.sflag [#allocation6], %s541
          %s543 = sand.u32 %s288, 1
          %s544 = scalar_lea.vmem [#allocation7], %s543
          %s546 = ssub.s32 16, 16
          %547 = vsyncadd %s542, %s546
          %s548 = smul.addr %s40, 16
          %s549 = scalar_lea.hbm %s9, %s548
          %s551 = sshll.u32 %s544, 4
          %s552 = int_to_ptr.vmem [resolvable:$true] %s551
          %554 = dma.hbm_to_vmem [thread:$0]  %s549, 16, %s552, %s542
        $region56: #{bert4rec_forward.2} parent=15 // pred_fallthru
          _
        // Predicated region
        $region57: #{bert4rec_forward.2} parent=15 // pred_check
          %p555 = pneg %p324
        $region58: #{bert4rec_forward.2} parent=15 // pred_check_branch
          %557 = sbr.rel (%p555) target = $region60
        $region59: #{bert4rec_forward.2} parent=15 // pred_region
          %p558 = scmp.lt.s32.totalorder %s40, 1
          %s559 = scalar_select %p558, %s40, 1
          %s560 = smul.addr %s559, 16
          %s561 = smul.addr %s560, 4
          %s562 = scalar_lea.vmem %s10, %s561
        $region60: #{bert4rec_forward.2} parent=15 // pred_fallthru
          _
        // Predicated region
        $region61: #{bert4rec_forward.2} parent=15 // pred_check
          %p563 = pneg %p350
        $region62: #{bert4rec_forward.2} parent=15 // pred_check_branch
          %565 = sbr.rel (%p563) target = $region64
        $region63: #{bert4rec_forward.2} parent=15 // pred_region
          %s566 = sand.u32 %s32, 1
          %s567 = scalar_lea.sflag [#allocation9], %s566
          %s568 = sand.u32 %s340, 1
          %s569 = scalar_lea.vmem [#allocation8], %s568
          %s571 = ssub.s32 16, 16
          %572 = vsyncadd %s567, %s571
          %s573 = smul.addr %s40, 16
          %s574 = scalar_lea.hbm %s11, %s573
          %s576 = sshll.u32 %s569, 4
          %s577 = int_to_ptr.vmem [resolvable:$true] %s576
          %579 = dma.hbm_to_vmem [thread:$0]  %s574, 16, %s577, %s567
        $region64: #{bert4rec_forward.2} parent=15 // pred_fallthru
          _
        // Predicated region
        $region65: #{bert4rec_forward.2} parent=15 // pred_check
          %p580 = pneg %p376
        $region66: #{bert4rec_forward.2} parent=15 // pred_check_branch
          %582 = sbr.rel (%p580) target = $region68
        $region67: #{bert4rec_forward.2} parent=15 // pred_region
          %s583 = sand.u32 %s32, 1
          %s584 = scalar_lea.sflag [#allocation9], %s583
          %s585 = sand.u32 %s366, 1
          %s586 = smul.addr %s585, 64
          %s587 = scalar_lea.vmem [#allocation10], %s586
          %s589 = ssub.s32 1024, 1024
          %590 = vsyncadd %s584, %s589
          %s591 = smul.addr %s40, 16
          %s592 = smul.addr %s591, 64
          %s593 = scalar_lea.hbm %s12, %s592
          %s594 = sshll.u32 %s587, 4
          %s595 = int_to_ptr.vmem [resolvable:$true] %s594
          %600 = dma.hbm_to_vmem [thread:$0]  %s593, 1024, %s595, %s584, 64, 64, 4
        $region68: #{bert4rec_forward.2} parent=15 // pred_fallthru
          _
        // Predicated region
        $region69: #{bert4rec_forward.2} parent=15 // pred_check
          %p601 = pneg %p402
        $region70: #{bert4rec_forward.2} parent=15 // pred_check_branch
          %603 = sbr.rel (%p601) target = $region72
        $region71: #{bert4rec_forward.2} parent=15 // pred_region
          %s604 = sand.u32 %s392, 1
          %s605 = scalar_lea.sflag [#allocation12], %s604
          %s606 = sand.u32 %s392, 1
          %s607 = scalar_lea.vmem [#allocation11], %s606
          %s609 = ssub.s32 16, 16
          %610 = vsyncadd %s605, %s609
          %s611 = smul.addr %s40, 16
          %s612 = scalar_lea.hbm %s13, %s611
          %s614 = sshll.u32 %s607, 4
          %s615 = int_to_ptr.vmem [resolvable:$true] %s614
          %617 = dma.hbm_to_vmem [thread:$0]  %s612, 16, %s615, %s605
        $region72: #{bert4rec_forward.2} parent=15 // pred_fallthru
          _
      $region16: #{bert4rec_forward.2} parent=5 // pred_fallthru
        _
      %p618 = scmp.le.s32.totalorder 1, %s32
      %p619 = scmp.lt.s32.totalorder %s32, 5
      %p620 = pnand %p618, %p619
      %p621 = pneg %p620
      // Predicated region
      $region73: #{bert4rec_forward.2} parent=5 // pred_check
        _
      $region74: #{bert4rec_forward.2} parent=5 // pred_check_branch
        %623 = sbr.rel (%p620) target = $region76
      $region75: #{bert4rec_forward.2} parent=5 // pred_region
        %s624 = ssub.s32 %s32, 1
        %s625 = sand.u32 %s161, 1
        %s626 = scalar_lea.sflag [#allocation4], %s625
        %s627 = sand.u32 %s161, 1
        %s628 = smul.addr %s627, 384
        %s629 = scalar_lea.vmem [#allocation3], %s628
        // Predicated region
        $region77: #{bert4rec_forward.2} parent=75 // pred_check
          %p630 = pneg %p174
        $region78: #{bert4rec_forward.2} parent=75 // pred_check_branch
          %632 = sbr.rel (%p630) target = $region80
        $region79: #{bert4rec_forward.2} parent=75 // pred_region
          %633 = dma.done %s626, 6144
        $region80: #{bert4rec_forward.2} parent=75 // pred_fallthru
          _
        %s634 = sand.u32 %s37, 1
        %s635 = scalar_lea.sflag [#allocation6], %s634
        %s636 = sand.u32 %s265, 1
        %s637 = scalar_lea.vmem [#allocation5], %s636
        // Predicated region
        $region81: #{bert4rec_forward.2} parent=75 // pred_check
          %p638 = pneg %p278
        $region82: #{bert4rec_forward.2} parent=75 // pred_check_branch
          %640 = sbr.rel (%p638) target = $region84
        $region83: #{bert4rec_forward.2} parent=75 // pred_region
          %641 = dma.done %s635, 16
        $region84: #{bert4rec_forward.2} parent=75 // pred_fallthru
          _
        %s642 = sand.u32 %s37, 1
        %s643 = scalar_lea.sflag [#allocation6], %s642
        %s644 = sand.u32 %s291, 1
        %s645 = scalar_lea.vmem [#allocation7], %s644
        // Predicated region
        $region85: #{bert4rec_forward.2} parent=75 // pred_check
          %p646 = pneg %p304
        $region86: #{bert4rec_forward.2} parent=75 // pred_check_branch
          %648 = sbr.rel (%p646) target = $region88
        $region87: #{bert4rec_forward.2} parent=75 // pred_region
          %649 = dma.done %s643, 16
        $region88: #{bert4rec_forward.2} parent=75 // pred_fallthru
          _
        %s650 = sand.u32 %s37, 1
        %s651 = scalar_lea.sflag [#allocation9], %s650
        %s652 = sand.u32 %s343, 1
        %s653 = scalar_lea.vmem [#allocation8], %s652
        // Predicated region
        $region89: #{bert4rec_forward.2} parent=75 // pred_check
          %p654 = pneg %p356
        $region90: #{bert4rec_forward.2} parent=75 // pred_check_branch
          %656 = sbr.rel (%p654) target = $region92
        $region91: #{bert4rec_forward.2} parent=75 // pred_region
          %657 = dma.done %s651, 16
        $region92: #{bert4rec_forward.2} parent=75 // pred_fallthru
          _
        %s658 = sand.u32 %s37, 1
        %s659 = scalar_lea.sflag [#allocation9], %s658
        %s660 = sand.u32 %s369, 1
        %s661 = smul.addr %s660, 64
        %s662 = scalar_lea.vmem [#allocation10], %s661
        // Predicated region
        $region93: #{bert4rec_forward.2} parent=75 // pred_check
          %p663 = pneg %p382
        $region94: #{bert4rec_forward.2} parent=75 // pred_check_branch
          %665 = sbr.rel (%p663) target = $region96
        $region95: #{bert4rec_forward.2} parent=75 // pred_region
          %666 = dma.done %s659, 1024
        $region96: #{bert4rec_forward.2} parent=75 // pred_fallthru
          _
        %s667 = sand.u32 %s395, 1
        %s668 = scalar_lea.sflag [#allocation12], %s667
        %s669 = sand.u32 %s395, 1
        %s670 = scalar_lea.vmem [#allocation11], %s669
        // Predicated region
        $region97: #{bert4rec_forward.2} parent=75 // pred_check
          %p671 = pneg %p408
        $region98: #{bert4rec_forward.2} parent=75 // pred_check_branch
          %673 = sbr.rel (%p671) target = $region100
        $region99: #{bert4rec_forward.2} parent=75 // pred_region
          %674 = dma.done %s668, 16
        $region100: #{bert4rec_forward.2} parent=75 // pred_fallthru
          _
        %p675 = scmp.lt.s32.totalorder %s41, 1
        %s676 = scalar_select %p675, %s41, 1
        %s677 = smul.addr %s676, 2
        %s678 = smul.addr %s677, 8
        %s679 = scalar_lea.vmem %s0, %s678
        %p680 = pneg %p70
        %p681 = pneg %p67
        %p682 = scmp.lt.s32.totalorder %s41, 1
        %s683 = scalar_select %p682, %s41, 1
        %s684 = scalar_lea.vmem %s1, %s683
        %p685 = pneg %p96
        %p686 = pneg %p93
        %p687 = scmp.lt.s32.totalorder %s42, 1
        %s688 = scalar_select %p687, %s42, 1
        %s689 = scalar_lea.vmem %s2, %s688
        %p690 = pneg %p122
        %p691 = pneg %p119
        %p692 = scmp.lt.s32.totalorder %s42, 1
        %s693 = scalar_select %p692, %s42, 1
        %s694 = scalar_lea.vmem %s3, %s693
        %p695 = pneg %p148
        %p696 = pneg %p145
        %s697 = sand.u32 %s161, 1
        %s698 = scalar_lea.sflag [#allocation4], %s697
        %s699 = sand.u32 %s161, 1
        %s700 = smul.addr %s699, 384
        %s701 = scalar_lea.vmem [#allocation3], %s700
        %p702 = pneg %p174
        %p703 = pneg %p171
        %p704 = scmp.lt.s32.totalorder %s42, 1
        %s705 = scalar_select %p704, %s42, 1
        %s706 = smul.addr %s705, 6
        %s707 = scalar_lea.vmem %s5, %s706
        %p708 = pneg %p200
        %p709 = pneg %p197
        %p710 = scmp.lt.s32.totalorder %s42, 1
        %s711 = scalar_select %p710, %s42, 1
        %s712 = smul.addr %s711, 32
        %s713 = smul.addr %s712, 4
        %s714 = scalar_lea.vmem %s6, %s713
        %p715 = pneg %p226
        %p716 = pneg %p223
        %p717 = scmp.lt.s32.totalorder %s42, 1
        %s718 = scalar_select %p717, %s42, 1
        %s719 = scalar_lea.vmem %s7, %s718
        %p720 = pneg %p252
        %p721 = pneg %p249
        %s722 = sand.u32 %s37, 1
        %s723 = scalar_lea.sflag [#allocation6], %s722
        %s724 = sand.u32 %s265, 1
        %s725 = scalar_lea.vmem [#allocation5], %s724
        %p726 = pneg %p278
        %p727 = pneg %p275
        %s728 = sand.u32 %s37, 1
        %s729 = scalar_lea.sflag [#allocation6], %s728
        %s730 = sand.u32 %s291, 1
        %s731 = scalar_lea.vmem [#allocation7], %s730
        %p732 = pneg %p304
        %p733 = pneg %p301
        %p734 = scmp.lt.s32.totalorder %s42, 1
        %s735 = scalar_select %p734, %s42, 1
        %s736 = smul.addr %s735, 16
        %s737 = smul.addr %s736, 4
        %s738 = scalar_lea.vmem %s10, %s737
        %p739 = pneg %p330
        %p740 = pneg %p327
        %s741 = sand.u32 %s37, 1
        %s742 = scalar_lea.sflag [#allocation9], %s741
        %s743 = sand.u32 %s343, 1
        %s744 = scalar_lea.vmem [#allocation8], %s743
        %p745 = pneg %p356
        %p746 = pneg %p353
        %s747 = sand.u32 %s37, 1
        %s748 = scalar_lea.sflag [#allocation9], %s747
        %s749 = sand.u32 %s369, 1
        %s750 = smul.addr %s749, 64
        %s751 = scalar_lea.vmem [#allocation10], %s750
        %p752 = pneg %p382
        %p753 = pneg %p379
        %s754 = sand.u32 %s395, 1
        %s755 = scalar_lea.sflag [#allocation12], %s754
        %s756 = sand.u32 %s395, 1
        %s757 = scalar_lea.vmem [#allocation11], %s756
        %p758 = pneg %p408
        %p759 = pneg %p405
        %p760 = pneg %p434
        %p761 = pneg %p431
        %p762 = scmp.lt.s32.totalorder %s41, 1
        %s763 = scalar_select %p762, %s41, 1
        %s764 = smul.addr %s763, 2
        %s765 = smul.addr %s764, 8
        %s766 = scalar_lea.vmem %s14, %s765
        %p767 = scmp.lt.s32.totalorder %s41, 1
        %s768 = scalar_select %p767, %s41, 1
        %s769 = smul.addr %s768, 2
        %s770 = smul.addr %s769, 8
        %s771 = scalar_lea.vmem %s0, %s770
        %p772 = scmp.lt.s32.totalorder %s41, 1
        %s773 = scalar_select %p772, %s41, 1
        %s774 = scalar_lea.vmem %s1, %s773
        %p775 = scmp.lt.s32.totalorder %s42, 1
        %s776 = scalar_select %p775, %s42, 1
        %s777 = scalar_lea.vmem %s2, %s776
        %p778 = scmp.lt.s32.totalorder %s42, 1
        %s779 = scalar_select %p778, %s42, 1
        %s780 = scalar_lea.vmem %s3, %s779
        %p781 = scmp.lt.s32.totalorder %s42, 1
        %s782 = scalar_select %p781, %s42, 1
        %s783 = smul.addr %s782, 6
        %s784 = scalar_lea.vmem %s5, %s783
        %p785 = scmp.lt.s32.totalorder %s42, 1
        %s786 = scalar_select %p785, %s42, 1
        %s787 = smul.addr %s786, 32
        %s788 = smul.addr %s787, 4
        %s789 = scalar_lea.vmem %s6, %s788
        %p790 = scmp.lt.s32.totalorder %s42, 1
        %s791 = scalar_select %p790, %s42, 1
        %s792 = scalar_lea.vmem %s7, %s791
        %p793 = scmp.lt.s32.totalorder %s42, 1
        %s794 = scalar_select %p793, %s42, 1
        %s795 = smul.addr %s794, 16
        %s796 = smul.addr %s795, 4
        %s797 = scalar_lea.vmem %s10, %s796
        %p798 = scmp.lt.s32.totalorder %s41, 1
        %s799 = scalar_select %p798, %s41, 1
        %s800 = smul.addr %s799, 2
        %s801 = smul.addr %s800, 8
        %s802 = scalar_lea.vmem %s14, %s801
        %p804 = scmp.eq.s32.totalorder %s42, 0
        // Predicated region
        $region101: #{bert4rec_forward.2} parent=75 // pred_check
          %p805 = pneg %p804
        $region102: #{bert4rec_forward.2} parent=75 // pred_check_branch
          %807 = sbr.rel (%p805) target = $region104
        $region103: #{bert4rec_forward.2} parent=75 // pred_region
          %v808 = vld [vmem:[%s771] sm:$0xff]
          %v809 = vld [vmem:[%s771 + $0x8] sm:$0xff]
          %810 = vst [vmem:[%s802] sm:$0xff] %v808
          %811 = vst [vmem:[%s802 + $0x8] sm:$0xff] %v809
        $region104: #{bert4rec_forward.2} parent=75 // pred_fallthru
          _
        %v812 = vlaneseq
        %v813 = vand.u32 %v812, 127
        %vm814 = vcmp.lt.s32.totalorder %v813, 32
        %v815 = vsel %vm814, 1, 0
        %v816 = vcvt.s32.f32 %v815
        %v817 = vld [vmem:[%s802] sm:$0xff]
        %v818 = vld [vmem:[%s802 + $0x8] sm:$0xff]
        %v819 = vld [vmem:[%s777] sm:$0x1]
        %v820 = vld [vmem:[%s780] sm:$0x1]
        %821 = vadd.xlane.f32.xlu0 %v817
        %v822 = vpop.xlane.xlu0 %821
        %823 = vadd.xlane.f32.xlu0 %v818
        %v824 = vpop.xlane.xlu0 %823
        %v825 = vmul.f32 %v822, 0.03125
        %v826 = vmul.f32 %v824, 0.03125
        %v827 = vsub.f32 %v817, %v825
        %v828 = vsub.f32 %v818, %v826
        %v829 = vmul.f32 %v827, %v816
        %v830 = vmul.f32 %v828, %v816
        %v831 = vmul.f32 %v829, %v829
        %v832 = vmul.f32 %v830, %v830
        %833 = vadd.xlane.f32.xlu0 %v831
        %v834 = vpop.xlane.xlu0 %833
        %835 = vadd.xlane.f32.xlu0 %v832
        %v836 = vpop.xlane.xlu0 %835
        %v837 = vmul.f32 %v834, 0.032258064
        %v838 = vmul.f32 %v836, 0.032258064
        %v839 = vrsqrt.pop %v837
        %v840 = vmul.f32 %v837, %v839
        %vm841 = vcmp.eq.f32.partialorder %v837, inf
        %v842 = vsel %vm841, %v837, %v840
        %vm843 = vcmp.eq.f32.partialorder %v837, 0.0
        %v844 = vand.u32 %v837, 2147483648
        %v845 = vsel %vm843, %v844, %v842
        %v846 = vrsqrt.pop %v838
        %v847 = vmul.f32 %v838, %v846
        %vm848 = vcmp.eq.f32.partialorder %v838, inf
        %v849 = vsel %vm848, %v838, %v847
        %vm850 = vcmp.eq.f32.partialorder %v838, 0.0
        %v851 = vand.u32 %v838, 2147483648
        %v852 = vsel %vm850, %v851, %v849
        %v853 = vadd.f32 %v845, 1e-06
        %v854 = vadd.f32 %v852, 1e-06
        %v855 = vrcp.pop %v853
        %v856 = vmul.f32 1.0, %v855
        %v857 = vrcp.pop %v854
        %v858 = vmul.f32 1.0, %v857
        %v859 = vmul.f32 %v829, %v856
        %v860 = vmul.f32 %v830, %v858
        %v862 = vlaneseq
        %v863 = vshrl.u32 %v862, 7
        %v864 = vsub.s32 0, %v863
        %v865 = vrot.slane %v819, %v864
        %v867 = vmul.f32 %v865, %v859
        %v868 = vmul.f32 %v865, %v860
        %v870 = vlaneseq
        %v871 = vshrl.u32 %v870, 7
        %v872 = vsub.s32 0, %v871
        %v873 = vrot.slane %v820, %v872
        %v875 = vadd.f32 %v867, %v873
        %v876 = vadd.f32 %v868, %v873
        %v877 = vpack.c.bf16 %v876, %v875
        %v878 = vld [vmem:[%s629] sm:$0xff]
        %v879 = vld [vmem:[%s629 + $0x8] sm:$0xff]
        %v880 = vld [vmem:[%s629 + $0x10] sm:$0xff]
        %v881 = vld [vmem:[%s629 + $0x18] sm:$0xff]
        %v882 = vld [vmem:[%s629 + $0x20] sm:$0xff]
        %v883 = vld [vmem:[%s629 + $0x28] sm:$0xff]
        %v884 = vld [vmem:[%s629 + $0x30] sm:$0xff]
        %v885 = vld [vmem:[%s629 + $0x38] sm:$0xff]
        %v886 = vld [vmem:[%s629 + $0x40] sm:$0xff]
        %v887 = vld [vmem:[%s629 + $0x48] sm:$0xff]
        %v888 = vld [vmem:[%s629 + $0x50] sm:$0xff]
        %v889 = vld [vmem:[%s629 + $0x58] sm:$0xff]
        %v890 = vld [vmem:[%s629 + $0x60] sm:$0xff]
        %v891 = vld [vmem:[%s629 + $0x68] sm:$0xff]
        %v892 = vld [vmem:[%s629 + $0x70] sm:$0xff]
        %v893 = vld [vmem:[%s629 + $0x78] sm:$0xff]
        %v894 = vld [vmem:[%s629 + $0x80] sm:$0xff]
        %v895 = vld [vmem:[%s629 + $0x88] sm:$0xff]
        %v896 = vld [vmem:[%s629 + $0x90] sm:$0xff]
        %v897 = vld [vmem:[%s629 + $0x98] sm:$0xff]
        %v898 = vld [vmem:[%s629 + $0xa0] sm:$0xff]
        %v899 = vld [vmem:[%s629 + $0xa8] sm:$0xff]
        %v900 = vld [vmem:[%s629 + $0xb0] sm:$0xff]
        %v901 = vld [vmem:[%s629 + $0xb8] sm:$0xff]
        %v902 = vld [vmem:[%s629 + $0xc0] sm:$0xff]
        %v903 = vld [vmem:[%s629 + $0xc8] sm:$0xff]
        %v904 = vld [vmem:[%s629 + $0xd0] sm:$0xff]
        %v905 = vld [vmem:[%s629 + $0xd8] sm:$0xff]
        %v906 = vld [vmem:[%s629 + $0xe0] sm:$0xff]
        %v907 = vld [vmem:[%s629 + $0xe8] sm:$0xff]
        %v908 = vld [vmem:[%s629 + $0xf0] sm:$0xff]
        %v909 = vld [vmem:[%s629 + $0xf8] sm:$0xff]
        %v910 = vld [vmem:[%s629 + $0x100] sm:$0xff]
        %v911 = vld [vmem:[%s629 + $0x108] sm:$0xff]
        %v912 = vld [vmem:[%s629 + $0x110] sm:$0xff]
        %v913 = vld [vmem:[%s629 + $0x118] sm:$0xff]
        %v914 = vld [vmem:[%s629 + $0x120] sm:$0xff]
        %v915 = vld [vmem:[%s629 + $0x128] sm:$0xff]
        %v916 = vld [vmem:[%s629 + $0x130] sm:$0xff]
        %v917 = vld [vmem:[%s629 + $0x138] sm:$0xff]
        %v918 = vld [vmem:[%s629 + $0x140] sm:$0xff]
        %v919 = vld [vmem:[%s629 + $0x148] sm:$0xff]
        %v920 = vld [vmem:[%s629 + $0x150] sm:$0xff]
        %v921 = vld [vmem:[%s629 + $0x158] sm:$0xff]
        %v922 = vld [vmem:[%s629 + $0x160] sm:$0xff]
        %v923 = vld [vmem:[%s629 + $0x168] sm:$0xff]
        %v924 = vld [vmem:[%s629 + $0x170] sm:$0xff]
        %v925 = vld [vmem:[%s629 + $0x178] sm:$0xff]
        %v926 = vld [vmem:[%s784] sm:$0x3f]
        %v928 = vlaneseq
        %v929 = vshrl.u32 %v928, 7
        %v930 = vsub.s32 0, %v929
        %v931 = vrot.slane %v926, %v930
        %v932 = vlaneseq
        %v933 = vshrl.u32 %v932, 7
        %v934 = vsub.s32 1, %v933
        %v935 = vrot.slane %v926, %v934
        %v936 = vlaneseq
        %v937 = vshrl.u32 %v936, 7
        %v938 = vsub.s32 2, %v937
        %v939 = vrot.slane %v926, %v938
        %v940 = vlaneseq
        %v941 = vshrl.u32 %v940, 7
        %v942 = vsub.s32 3, %v941
        %v943 = vrot.slane %v926, %v942
        %v944 = vlaneseq
        %v945 = vshrl.u32 %v944, 7
        %v946 = vsub.s32 4, %v945
        %v947 = vrot.slane %v926, %v946
        %v948 = vlaneseq
        %v949 = vshrl.u32 %v948, 7
        %v950 = vsub.s32 5, %v949
        %v951 = vrot.slane %v926, %v950
        %v1006 = vunpack.c.l.b16 %v878
        %v1007 = vunpack.c.h.b16 %v878
        %v1008 = vunpack.c.l.b16 %v879
        %v1009 = vunpack.c.h.b16 %v879
        %v1010 = vunpack.c.l.b16 %v880
        %v1011 = vunpack.c.h.b16 %v880
        %v1012 = vunpack.c.l.b16 %v881
        %v1013 = vunpack.c.h.b16 %v881
        %v1014 = vunpack.c.l.b16 %v882
        %v1015 = vunpack.c.h.b16 %v882
        %v1016 = vunpack.c.l.b16 %v883
        %v1017 = vunpack.c.h.b16 %v883
        %v1018 = vunpack.c.l.b16 %v884
        %v1019 = vunpack.c.h.b16 %v884
        %v1020 = vunpack.c.l.b16 %v885
        %v1021 = vunpack.c.h.b16 %v885
        %v1022 = vunpack.c.l.b16 %v886
        %v1023 = vunpack.c.h.b16 %v886
        %v1024 = vunpack.c.l.b16 %v887
        %v1025 = vunpack.c.h.b16 %v887
        %v1026 = vunpack.c.l.b16 %v888
        %v1027 = vunpack.c.h.b16 %v888
        %v1028 = vunpack.c.l.b16 %v889
        %v1029 = vunpack.c.h.b16 %v889
        %v1030 = vunpack.c.l.b16 %v890
        %v1031 = vunpack.c.h.b16 %v890
        %v1032 = vunpack.c.l.b16 %v891
        %v1033 = vunpack.c.h.b16 %v891
        %v1034 = vunpack.c.l.b16 %v892
        %v1035 = vunpack.c.h.b16 %v892
        %v1036 = vunpack.c.l.b16 %v893
        %v1037 = vunpack.c.h.b16 %v893
        %v1038 = vunpack.c.l.b16 %v894
        %v1039 = vunpack.c.h.b16 %v894
        %v1040 = vunpack.c.l.b16 %v895
        %v1041 = vunpack.c.h.b16 %v895
        %v1042 = vunpack.c.l.b16 %v896
        %v1043 = vunpack.c.h.b16 %v896
        %v1044 = vunpack.c.l.b16 %v897
        %v1045 = vunpack.c.h.b16 %v897
        %v1046 = vunpack.c.l.b16 %v898
        %v1047 = vunpack.c.h.b16 %v898
        %v1048 = vunpack.c.l.b16 %v899
        %v1049 = vunpack.c.h.b16 %v899
        %v1050 = vunpack.c.l.b16 %v900
        %v1051 = vunpack.c.h.b16 %v900
        %v1052 = vunpack.c.l.b16 %v901
        %v1053 = vunpack.c.h.b16 %v901
        %v1054 = vunpack.c.l.b16 %v902
        %v1055 = vunpack.c.h.b16 %v902
        %v1056 = vunpack.c.l.b16 %v903
        %v1057 = vunpack.c.h.b16 %v903
        %v1058 = vunpack.c.l.b16 %v904
        %v1059 = vunpack.c.h.b16 %v904
        %v1060 = vunpack.c.l.b16 %v905
        %v1061 = vunpack.c.h.b16 %v905
        %v1062 = vunpack.c.l.b16 %v906
        %v1063 = vunpack.c.h.b16 %v906
        %v1064 = vunpack.c.l.b16 %v907
        %v1065 = vunpack.c.h.b16 %v907
        %v1066 = vunpack.c.l.b16 %v908
        %v1067 = vunpack.c.h.b16 %v908
        %v1068 = vunpack.c.l.b16 %v909
        %v1069 = vunpack.c.h.b16 %v909
        %v1070 = vunpack.c.l.b16 %v910
        %v1071 = vunpack.c.h.b16 %v910
        %v1072 = vunpack.c.l.b16 %v911
        %v1073 = vunpack.c.h.b16 %v911
        %v1074 = vunpack.c.l.b16 %v912
        %v1075 = vunpack.c.h.b16 %v912
        %v1076 = vunpack.c.l.b16 %v913
        %v1077 = vunpack.c.h.b16 %v913
        %v1078 = vunpack.c.l.b16 %v914
        %v1079 = vunpack.c.h.b16 %v914
        %v1080 = vunpack.c.l.b16 %v915
        %v1081 = vunpack.c.h.b16 %v915
        %v1082 = vunpack.c.l.b16 %v916
        %v1083 = vunpack.c.h.b16 %v916
        %v1084 = vunpack.c.l.b16 %v917
        %v1085 = vunpack.c.h.b16 %v917
        %v1086 = vunpack.c.l.b16 %v918
        %v1087 = vunpack.c.h.b16 %v918
        %v1088 = vunpack.c.l.b16 %v919
        %v1089 = vunpack.c.h.b16 %v919
        %v1090 = vunpack.c.l.b16 %v920
        %v1091 = vunpack.c.h.b16 %v920
        %v1092 = vunpack.c.l.b16 %v921
        %v1093 = vunpack.c.h.b16 %v921
        %v1094 = vunpack.c.l.b16 %v922
        %v1095 = vunpack.c.h.b16 %v922
        %v1096 = vunpack.c.l.b16 %v923
        %v1097 = vunpack.c.h.b16 %v923
        %v1098 = vunpack.c.l.b16 %v924
        %v1099 = vunpack.c.h.b16 %v924
        %v1100 = vunpack.c.l.b16 %v925
        %v1101 = vunpack.c.h.b16 %v925
        %v1102 = vpack.c.b16 %v1012, %v1006
        %v1103 = vpack.c.b16 %v1013, %v1007
        %v1104 = vpack.c.b16 %v1014, %v1008
        %v1105 = vpack.c.b16 %v1015, %v1009
        %v1106 = vpack.c.b16 %v1016, %v1010
        %v1107 = vpack.c.b16 %v1017, %v1011
        %v1108 = vpack.c.b16 %v1024, %v1018
        %v1109 = vpack.c.b16 %v1025, %v1019
        %v1110 = vpack.c.b16 %v1026, %v1020
        %v1111 = vpack.c.b16 %v1027, %v1021
        %v1112 = vpack.c.b16 %v1028, %v1022
        %v1113 = vpack.c.b16 %v1029, %v1023
        %v1114 = vpack.c.b16 %v1036, %v1030
        %v1115 = vpack.c.b16 %v1037, %v1031
        %v1116 = vpack.c.b16 %v1038, %v1032
        %v1117 = vpack.c.b16 %v1039, %v1033
        %v1118 = vpack.c.b16 %v1040, %v1034
        %v1119 = vpack.c.b16 %v1041, %v1035
        %v1120 = vpack.c.b16 %v1048, %v1042
        %v1121 = vpack.c.b16 %v1049, %v1043
        %v1122 = vpack.c.b16 %v1050, %v1044
        %v1123 = vpack.c.b16 %v1051, %v1045
        %v1124 = vpack.c.b16 %v1052, %v1046
        %v1125 = vpack.c.b16 %v1053, %v1047
        %v1126 = vpack.c.b16 %v1060, %v1054
        %v1127 = vpack.c.b16 %v1061, %v1055
        %v1128 = vpack.c.b16 %v1062, %v1056
        %v1129 = vpack.c.b16 %v1063, %v1057
        %v1130 = vpack.c.b16 %v1064, %v1058
        %v1131 = vpack.c.b16 %v1065, %v1059
        %v1132 = vpack.c.b16 %v1072, %v1066
        %v1133 = vpack.c.b16 %v1073, %v1067
        %v1134 = vpack.c.b16 %v1074, %v1068
        %v1135 = vpack.c.b16 %v1075, %v1069
        %v1136 = vpack.c.b16 %v1076, %v1070
        %v1137 = vpack.c.b16 %v1077, %v1071
        %v1138 = vpack.c.b16 %v1084, %v1078
        %v1139 = vpack.c.b16 %v1085, %v1079
        %v1140 = vpack.c.b16 %v1086, %v1080
        %v1141 = vpack.c.b16 %v1087, %v1081
        %v1142 = vpack.c.b16 %v1088, %v1082
        %v1143 = vpack.c.b16 %v1089, %v1083
        %v1144 = vpack.c.b16 %v1096, %v1090
        %v1145 = vpack.c.b16 %v1097, %v1091
        %v1146 = vpack.c.b16 %v1098, %v1092
        %v1147 = vpack.c.b16 %v1099, %v1093
        %v1148 = vpack.c.b16 %v1100, %v1094
        %v1149 = vpack.c.b16 %v1101, %v1095
        %1198 = vmatprep.subr.bf16.mxu0 %v1145
        %1199 = vmatpush1.bf16.msra.mxu0 %v1144
        %1200 = vmatprep.subr.bf16.mxu0 %v1139
        %1201 = vmatpush1.bf16.msra.mxu0 %v1138
        %1202 = vmatprep.subr.bf16.mxu0 %v1133
        %1203 = vmatpush1.bf16.msra.mxu0 %v1132
        %1204 = vmatprep.subr.bf16.mxu0 %v1127
        %1205 = vmatpush1.bf16.msra.mxu0 %v1126
        %1206 = vmatprep.subr.bf16.mxu0 %v1121
        %1207 = vmatpush1.bf16.msra.mxu0 %v1120
        %1208 = vmatprep.subr.bf16.mxu0 %v1115
        %1209 = vmatpush1.bf16.msra.mxu0 %v1114
        %1210 = vmatprep.subr.bf16.mxu0 %v1109
        %1211 = vmatpush1.bf16.msra.mxu0 %v1108
        %1212 = vmatprep.subr.bf16.mxu0 %v1103
        %1213 = vmatpush1.bf16.msra.mxu0 %v1102
        %1214 = vmatprep.subr.bf16.mxu0 0
        %1215 = vmatpush2.bf16.msra.mxu0 0
        %1216 = vmatprep.subr.bf16.mxu0 0
        %1217 = vmatpush2.bf16.msra.mxu0 0
        %1218 = vmatprep.subr.bf16.mxu0 0
        %1219 = vmatpush2.bf16.msra.mxu0 0
        %1220 = vmatprep.subr.bf16.mxu0 0
        %1221 = vmatpush2.bf16.msra.mxu0 0
        %1222 = vmatprep.subr.bf16.mxu0 0
        %1223 = vmatpush2.bf16.msra.mxu0 0
        %1224 = vmatprep.subr.bf16.mxu0 0
        %1225 = vmatpush2.bf16.msra.mxu0 0
        %1226 = vmatprep.subr.bf16.mxu0 0
        %1227 = vmatpush2.bf16.msra.mxu0 0
        %1228 = vmatprep.subr.bf16.mxu0 0
        %1229 = vmatpush2.bf16.msra.mxu0 0
        %1230 = vmatprep.mubr.bf16.mxu0 0
        %1231 = vmatmul.mubr.bf16.gmra.mxu0 %v877
        %v1232 = vpop.f32.mrf.mxu0
        %v1233 = vadd.f32 %v931, %v1232
        %v1234 = vpop.f32.mrf.mxu0
        %v1235 = vadd.f32 %v935, %v1234
        %v1236 = vpop.f32.mrf.mxu0
        %v1237 = vadd.f32 %v931, %v1236
        %v1238 = vpop.f32.mrf.mxu0
        %v1239 = vadd.f32 %v935, %v1238
        %1240 = vdwg.mxu0
        %1241 = vmatprep.subr.bf16.mxu0 %v1147
        %1242 = vmatpush1.bf16.msra.mxu0 %v1146
        %1243 = vmatprep.subr.bf16.mxu0 %v1141
        %1244 = vmatpush1.bf16.msra.mxu0 %v1140
        %1245 = vmatprep.subr.bf16.mxu0 %v1135
        %1246 = vmatpush1.bf16.msra.mxu0 %v1134
        %1247 = vmatprep.subr.bf16.mxu0 %v1129
        %1248 = vmatpush1.bf16.msra.mxu0 %v1128
        %1249 = vmatprep.subr.bf16.mxu0 %v1123
        %1250 = vmatpush1.bf16.msra.mxu0 %v1122
        %1251 = vmatprep.subr.bf16.mxu0 %v1117
        %1252 = vmatpush1.bf16.msra.mxu0 %v1116
        %1253 = vmatprep.subr.bf16.mxu0 %v1111
        %1254 = vmatpush1.bf16.msra.mxu0 %v1110
        %1255 = vmatprep.subr.bf16.mxu0 %v1105
        %1256 = vmatpush1.bf16.msra.mxu0 %v1104
        %1257 = vmatprep.subr.bf16.mxu0 0
        %1258 = vmatpush2.bf16.msra.mxu0 0
        %1259 = vmatprep.subr.bf16.mxu0 0
        %1260 = vmatpush2.bf16.msra.mxu0 0
        %1261 = vmatprep.subr.bf16.mxu0 0
        %1262 = vmatpush2.bf16.msra.mxu0 0
        %1263 = vmatprep.subr.bf16.mxu0 0
        %1264 = vmatpush2.bf16.msra.mxu0 0
        %1265 = vmatprep.subr.bf16.mxu0 0
        %1266 = vmatpush2.bf16.msra.mxu0 0
        %1267 = vmatprep.subr.bf16.mxu0 0
        %1268 = vmatpush2.bf16.msra.mxu0 0
        %1269 = vmatprep.subr.bf16.mxu0 0
        %1270 = vmatpush2.bf16.msra.mxu0 0
        %1271 = vmatprep.subr.bf16.mxu0 0
        %1272 = vmatpush2.bf16.msra.mxu0 0
        %1273 = vmatprep.mubr.bf16.mxu0 0
        %1274 = vmatmul.mubr.bf16.gmra.mxu0 %v877
        %v1275 = vpop.f32.mrf.mxu0
        %v1276 = vadd.f32 %v939, %v1275
        %v1277 = vpop.f32.mrf.mxu0
        %v1278 = vadd.f32 %v943, %v1277
        %v1279 = vpop.f32.mrf.mxu0
        %v1280 = vadd.f32 %v939, %v1279
        %v1281 = vpop.f32.mrf.mxu0
        %v1282 = vadd.f32 %v943, %v1281
        %1283 = vdwg.mxu0
        %1284 = vmatprep.subr.bf16.mxu0 %v1149
        %1285 = vmatpush1.bf16.msra.mxu0 %v1148
        %1286 = vmatprep.subr.bf16.mxu0 %v1143
        %1287 = vmatpush1.bf16.msra.mxu0 %v1142
        %1288 = vmatprep.subr.bf16.mxu0 %v1137
        %1289 = vmatpush1.bf16.msra.mxu0 %v1136
        %1290 = vmatprep.subr.bf16.mxu0 %v1131
        %1291 = vmatpush1.bf16.msra.mxu0 %v1130
        %1292 = vmatprep.subr.bf16.mxu0 %v1125
        %1293 = vmatpush1.bf16.msra.mxu0 %v1124
        %1294 = vmatprep.subr.bf16.mxu0 %v1119
        %1295 = vmatpush1.bf16.msra.mxu0 %v1118
        %1296 = vmatprep.subr.bf16.mxu0 %v1113
        %1297 = vmatpush1.bf16.msra.mxu0 %v1112
        %1298 = vmatprep.subr.bf16.mxu0 %v1107
        %1299 = vmatpush1.bf16.msra.mxu0 %v1106
        %1300 = vmatprep.subr.bf16.mxu0 0
        %1301 = vmatpush2.bf16.msra.mxu0 0
        %1302 = vmatprep.subr.bf16.mxu0 0
        %1303 = vmatpush2.bf16.msra.mxu0 0
        %1304 = vmatprep.subr.bf16.mxu0 0
        %1305 = vmatpush2.bf16.msra.mxu0 0
        %1306 = vmatprep.subr.bf16.mxu0 0
        %1307 = vmatpush2.bf16.msra.mxu0 0
        %1308 = vmatprep.subr.bf16.mxu0 0
        %1309 = vmatpush2.bf16.msra.mxu0 0
        %1310 = vmatprep.subr.bf16.mxu0 0
        %1311 = vmatpush2.bf16.msra.mxu0 0
        %1312 = vmatprep.subr.bf16.mxu0 0
        %1313 = vmatpush2.bf16.msra.mxu0 0
        %1314 = vmatprep.subr.bf16.mxu0 0
        %1315 = vmatpush2.bf16.msra.mxu0 0
        %1316 = vmatprep.mubr.bf16.mxu0 0
        %1317 = vmatmul.mubr.bf16.gmra.mxu0 %v877
        %v1318 = vpop.f32.mrf.mxu0
        %v1319 = vadd.f32 %v947, %v1318
        %v1320 = vpop.f32.mrf.mxu0
        %v1321 = vadd.f32 %v951, %v1320
        %v1322 = vpop.f32.mrf.mxu0
        %v1323 = vadd.f32 %v947, %v1322
        %v1324 = vpop.f32.mrf.mxu0
        %v1325 = vadd.f32 %v951, %v1324
        %1326 = vdwg.mxu0
        %v1327 = vld [vmem:[%s774] sm:$0x1]
        %v1328 = vpack.c.bf16 %v1237, %v1233
        %v1329 = vpack.c.bf16 %v1280, %v1276
        %v1331 = vlaneseq
        %v1332 = vshrl.u32 %v1331, 7
        %v1333 = vsub.s32 0, %v1332
        %v1334 = vrot.slane %v1327, %v1333
        %1336 = vmatprep.subr.bf16.mxu0 0
        %1337 = vmatpush1.bf16.xpose.msra.mxu0 0
        %1338 = vmatprep.subr.bf16.mxu0 0
        %1339 = vmatpush1.bf16.xpose.msra.mxu0 0
        %1340 = vmatprep.subr.bf16.mxu0 0
        %1341 = vmatpush1.bf16.xpose.msra.mxu0 0
        %1342 = vmatprep.subr.bf16.mxu0 0
        %1343 = vmatpush1.bf16.xpose.msra.mxu0 0
        %1344 = vmatprep.subr.bf16.mxu0 0
        %1345 = vmatpush1.bf16.xpose.msra.mxu0 0
        %1346 = vmatprep.subr.bf16.mxu0 0
        %1347 = vmatpush1.bf16.xpose.msra.mxu0 0
        %1348 = vmatprep.subr.bf16.mxu0 0
        %1349 = vmatpush1.bf16.xpose.msra.mxu0 0
        %1350 = vmatprep.subr.bf16.mxu0 0
        %1351 = vmatpush1.bf16.xpose.msra.mxu0 %v1329
        %1352 = vmatprep.subr.bf16.mxu0 0
        %1353 = vmatpush2.bf16.xpose.msra.mxu0 0
        %1354 = vmatprep.subr.bf16.mxu0 0
        %1355 = vmatpush2.bf16.xpose.msra.mxu0 0
        %1356 = vmatprep.subr.bf16.mxu0 0
        %1357 = vmatpush2.bf16.xpose.msra.mxu0 0
        %1358 = vmatprep.subr.bf16.mxu0 0
        %1359 = vmatpush2.bf16.xpose.msra.mxu0 0
        %1360 = vmatprep.subr.bf16.mxu0 0
        %1361 = vmatpush2.bf16.xpose.msra.mxu0 0
        %1362 = vmatprep.subr.bf16.mxu0 0
        %1363 = vmatpush2.bf16.xpose.msra.mxu0 0
        %1364 = vmatprep.subr.bf16.mxu0 0
        %1365 = vmatpush2.bf16.xpose.msra.mxu0 0
        %1366 = vmatprep.subr.bf16.mxu0 0
        %1367 = vmatpush2.bf16.xpose.msra.mxu0 0
        %1368 = vmatprep.mubr.bf16.mxu0 0
        %1369 = vmatmul.mubr.bf16.gmra.mxu0 %v1328
        %v1370 = vpop.f32.mrf.mxu0
        %v1371 = vadd.f32 %v1334, %v1370
        %v1372 = vpop.f32.mrf.mxu0
        %v1373 = vpop.f32.mrf.mxu0
        %v1374 = vadd.f32 %v1334, %v1373
        %v1375 = vpop.f32.mrf.mxu0
        %1376 = vdwg.mxu0
        %vm1377 = vcmask 130048
        %v1378 = vsel %vm1377, %v1371, -inf
        %1379 = vmax.xlane.f32.xlu0 %v1378
        %v1380 = vpop.xlane.xlu0 %1379
        %v1381 = vsel %vm1377, %v1374, -inf
        %1382 = vmax.xlane.f32.xlu0 %v1381
        %v1383 = vpop.xlane.xlu0 %1382
        %v1384 = vsub.f32 %v1371, %v1380
        %v1385 = vsub.f32 %v1374, %v1383
        %v1386 = vmul.f32 %v1384, 1.442695
        %v1387 = vpow.pop %v1386
        %v1388 = vmul.f32 %v1385, 1.442695
        %v1389 = vpow.pop %v1388
        %v1390 = vsel %vm1377, %v1387, 0.0
        %1391 = vadd.xlane.f32.xlu0 %v1390
        %v1392 = vpop.xlane.xlu0 %1391
        %v1393 = vsel %vm1377, %v1389, 0.0
        %1394 = vadd.xlane.f32.xlu0 %v1393
        %v1395 = vpop.xlane.xlu0 %1394
        %v1396 = vrcp.pop %v1392
        %v1397 = vrcp.pop %v1395
        %v1398 = vmul.f32 %v1387, %v1396
        %v1399 = vmul.f32 %v1389, %v1397
        %v1400 = vpack.c.bf16 %v1399, %v1398
        %v1401 = vpack.c.bf16 %v1323, %v1319
        %v1403 = vsel %vm1377, %v1400, 0
        %1405 = vmatprep.subr.bf16.mxu0 0
        %1406 = vmatpush1.bf16.msra.mxu0 0
        %1407 = vmatprep.subr.bf16.mxu0 0
        %1408 = vmatpush1.bf16.msra.mxu0 0
        %1409 = vmatprep.subr.bf16.mxu0 0
        %1410 = vmatpush1.bf16.msra.mxu0 0
        %1411 = vmatprep.subr.bf16.mxu0 0
        %1412 = vmatpush1.bf16.msra.mxu0 0
        %1413 = vmatprep.subr.bf16.mxu0 0
        %1414 = vmatpush1.bf16.msra.mxu0 0
        %1415 = vmatprep.subr.bf16.mxu0 0
        %1416 = vmatpush1.bf16.msra.mxu0 0
        %1417 = vmatprep.subr.bf16.mxu0 0
        %1418 = vmatpush1.bf16.msra.mxu0 0
        %1419 = vmatprep.subr.bf16.mxu0 0
        %1420 = vmatpush1.bf16.msra.mxu0 %v1401
        %1421 = vmatprep.subr.bf16.mxu0 0
        %1422 = vmatpush2.bf16.msra.mxu0 0
        %1423 = vmatprep.subr.bf16.mxu0 0
        %1424 = vmatpush2.bf16.msra.mxu0 0
        %1425 = vmatprep.subr.bf16.mxu0 0
        %1426 = vmatpush2.bf16.msra.mxu0 0
        %1427 = vmatprep.subr.bf16.mxu0 0
        %1428 = vmatpush2.bf16.msra.mxu0 0
        %1429 = vmatprep.subr.bf16.mxu0 0
        %1430 = vmatpush2.bf16.msra.mxu0 0
        %1431 = vmatprep.subr.bf16.mxu0 0
        %1432 = vmatpush2.bf16.msra.mxu0 0
        %1433 = vmatprep.subr.bf16.mxu0 0
        %1434 = vmatpush2.bf16.msra.mxu0 0
        %1435 = vmatprep.subr.bf16.mxu0 0
        %1436 = vmatpush2.bf16.msra.mxu0 0
        %1437 = vmatprep.mubr.bf16.mxu0 0
        %1438 = vmatmul.mubr.bf16.gmra.mxu0 %v1403
        %v1439 = vpop.f32.mrf.mxu0
        %v1440 = vadd.f32 0.0, %v1439
        %v1441 = vpop.f32.mrf.mxu0
        %v1442 = vpop.f32.mrf.mxu0
        %v1443 = vadd.f32 0.0, %v1442
        %v1444 = vpop.f32.mrf.mxu0
        %1445 = vdwg.mxu0
        %v1446 = vpack.c.bf16 %v1443, %v1440
        %v1448 = vunpack.c.l.b16 %v1446
        %v1449 = vunpack.c.h.b16 %v1446
        %v1450 = vpack.c.b16 %v1448, %v1448
        %v1451 = vpack.c.b16 %v1449, %v1449
        %1454 = vst [vmem:[#allocation2] sm:$0xf] %v1450
        %1455 = vst [vmem:[#allocation2 + $0x8] sm:$0xf] %v1451
        %v1456 = vpack.c.bf16 %v1239, %v1235
        %v1457 = vpack.c.bf16 %v1282, %v1278
        %1458 = vmatprep.subr.bf16.mxu0 0
        %1459 = vmatpush1.bf16.xpose.msra.mxu0 0
        %1460 = vmatprep.subr.bf16.mxu0 0
        %1461 = vmatpush1.bf16.xpose.msra.mxu0 0
        %1462 = vmatprep.subr.bf16.mxu0 0
        %1463 = vmatpush1.bf16.xpose.msra.mxu0 0
        %1464 = vmatprep.subr.bf16.mxu0 0
        %1465 = vmatpush1.bf16.xpose.msra.mxu0 0
        %1466 = vmatprep.subr.bf16.mxu0 0
        %1467 = vmatpush1.bf16.xpose.msra.mxu0 0
        %1468 = vmatprep.subr.bf16.mxu0 0
        %1469 = vmatpush1.bf16.xpose.msra.mxu0 0
        %1470 = vmatprep.subr.bf16.mxu0 0
        %1471 = vmatpush1.bf16.xpose.msra.mxu0 0
        %1472 = vmatprep.subr.bf16.mxu0 0
        %1473 = vmatpush1.bf16.xpose.msra.mxu0 %v1457
        %1474 = vmatprep.subr.bf16.mxu0 0
        %1475 = vmatpush2.bf16.xpose.msra.mxu0 0
        %1476 = vmatprep.subr.bf16.mxu0 0
        %1477 = vmatpush2.bf16.xpose.msra.mxu0 0
        %1478 = vmatprep.subr.bf16.mxu0 0
        %1479 = vmatpush2.bf16.xpose.msra.mxu0 0
        %1480 = vmatprep.subr.bf16.mxu0 0
        %1481 = vmatpush2.bf16.xpose.msra.mxu0 0
        %1482 = vmatprep.subr.bf16.mxu0 0
        %1483 = vmatpush2.bf16.xpose.msra.mxu0 0
        %1484 = vmatprep.subr.bf16.mxu0 0
        %1485 = vmatpush2.bf16.xpose.msra.mxu0 0
        %1486 = vmatprep.subr.bf16.mxu0 0
        %1487 = vmatpush2.bf16.xpose.msra.mxu0 0
        %1488 = vmatprep.subr.bf16.mxu0 0
        %1489 = vmatpush2.bf16.xpose.msra.mxu0 0
        %1490 = vmatprep.mubr.bf16.mxu0 0
        %1491 = vmatmul.mubr.bf16.gmra.mxu0 %v1456
        %v1492 = vpop.f32.mrf.mxu0
        %v1493 = vadd.f32 %v1334, %v1492
        %v1494 = vpop.f32.mrf.mxu0
        %v1495 = vpop.f32.mrf.mxu0
        %v1496 = vadd.f32 %v1334, %v1495
        %v1497 = vpop.f32.mrf.mxu0
        %1498 = vdwg.mxu0
        %v1499 = vsel %vm1377, %v1493, -inf
        %1500 = vmax.xlane.f32.xlu0 %v1499
        %v1501 = vpop.xlane.xlu0 %1500
        %v1502 = vsel %vm1377, %v1496, -inf
        %1503 = vmax.xlane.f32.xlu0 %v1502
        %v1504 = vpop.xlane.xlu0 %1503
        %v1505 = vsub.f32 %v1493, %v1501
        %v1506 = vsub.f32 %v1496, %v1504
        %v1507 = vmul.f32 %v1505, 1.442695
        %v1508 = vpow.pop %v1507
        %v1509 = vmul.f32 %v1506, 1.442695
        %v1510 = vpow.pop %v1509
        %v1511 = vsel %vm1377, %v1508, 0.0
        %1512 = vadd.xlane.f32.xlu0 %v1511
        %v1513 = vpop.xlane.xlu0 %1512
        %v1514 = vsel %vm1377, %v1510, 0.0
        %1515 = vadd.xlane.f32.xlu0 %v1514
        %v1516 = vpop.xlane.xlu0 %1515
        %v1517 = vrcp.pop %v1513
        %v1518 = vrcp.pop %v1516
        %v1519 = vmul.f32 %v1508, %v1517
        %v1520 = vmul.f32 %v1510, %v1518
        %v1521 = vpack.c.bf16 %v1520, %v1519
        %v1522 = vpack.c.bf16 %v1325, %v1321
        %v1524 = vsel %vm1377, %v1521, 0
        %1526 = vmatprep.subr.bf16.mxu0 0
        %1527 = vmatpush1.bf16.msra.mxu0 0
        %1528 = vmatprep.subr.bf16.mxu0 0
        %1529 = vmatpush1.bf16.msra.mxu0 0
        %1530 = vmatprep.subr.bf16.mxu0 0
        %1531 = vmatpush1.bf16.msra.mxu0 0
        %1532 = vmatprep.subr.bf16.mxu0 0
        %1533 = vmatpush1.bf16.msra.mxu0 0
        %1534 = vmatprep.subr.bf16.mxu0 0
        %1535 = vmatpush1.bf16.msra.mxu0 0
        %1536 = vmatprep.subr.bf16.mxu0 0
        %1537 = vmatpush1.bf16.msra.mxu0 0
        %1538 = vmatprep.subr.bf16.mxu0 0
        %1539 = vmatpush1.bf16.msra.mxu0 0
        %1540 = vmatprep.subr.bf16.mxu0 0
        %1541 = vmatpush1.bf16.msra.mxu0 %v1522
        %1542 = vmatprep.subr.bf16.mxu0 0
        %1543 = vmatpush2.bf16.msra.mxu0 0
        %1544 = vmatprep.subr.bf16.mxu0 0
        %1545 = vmatpush2.bf16.msra.mxu0 0
        %1546 = vmatprep.subr.bf16.mxu0 0
        %1547 = vmatpush2.bf16.msra.mxu0 0
        %1548 = vmatprep.subr.bf16.mxu0 0
        %1549 = vmatpush2.bf16.msra.mxu0 0
        %1550 = vmatprep.subr.bf16.mxu0 0
        %1551 = vmatpush2.bf16.msra.mxu0 0
        %1552 = vmatprep.subr.bf16.mxu0 0
        %1553 = vmatpush2.bf16.msra.mxu0 0
        %1554 = vmatprep.subr.bf16.mxu0 0
        %1555 = vmatpush2.bf16.msra.mxu0 0
        %1556 = vmatprep.subr.bf16.mxu0 0
        %1557 = vmatpush2.bf16.msra.mxu0 0
        %1558 = vmatprep.mubr.bf16.mxu0 0
        %1559 = vmatmul.mubr.bf16.gmra.mxu0 %v1524
        %v1560 = vpop.f32.mrf.mxu0
        %v1561 = vadd.f32 0.0, %v1560
        %v1562 = vpop.f32.mrf.mxu0
        %v1563 = vpop.f32.mrf.mxu0
        %v1564 = vadd.f32 0.0, %v1563
        %v1565 = vpop.f32.mrf.mxu0
        %1566 = vdwg.mxu0
        %v1567 = vpack.c.bf16 %v1564, %v1561
        %v1569 = vunpack.c.l.b16 %v1567
        %v1570 = vunpack.c.h.b16 %v1567
        %v1571 = vpack.c.b16 %v1569, %v1569
        %v1572 = vpack.c.b16 %v1570, %v1570
        %1575 = vst [vmem:[#allocation2 + $0x4] sm:$0xf] %v1571
        %1576 = vst [vmem:[#allocation2 + $0xc] sm:$0xf] %v1572
        %v1577 = vld [vmem:[#allocation2] sm:$0xff]
        %v1578 = vld [vmem:[#allocation2 + $0x8] sm:$0xff]
        %v1579 = vld [vmem:[%s789] sm:$0xf]
        %v1580 = vld [vmem:[%s789 + $0x4] sm:$0xf]
        %v1581 = vld [vmem:[%s789 + $0x8] sm:$0xf]
        %v1582 = vld [vmem:[%s789 + $0xc] sm:$0xf]
        %v1583 = vld [vmem:[%s789 + $0x10] sm:$0xf]
        %v1584 = vld [vmem:[%s789 + $0x14] sm:$0xf]
        %v1585 = vld [vmem:[%s789 + $0x18] sm:$0xf]
        %v1586 = vld [vmem:[%s789 + $0x1c] sm:$0xf]
        %v1587 = vld [vmem:[%s789 + $0x20] sm:$0xf]
        %v1588 = vld [vmem:[%s789 + $0x24] sm:$0xf]
        %v1589 = vld [vmem:[%s789 + $0x28] sm:$0xf]
        %v1590 = vld [vmem:[%s789 + $0x2c] sm:$0xf]
        %v1591 = vld [vmem:[%s789 + $0x30] sm:$0xf]
        %v1592 = vld [vmem:[%s789 + $0x34] sm:$0xf]
        %v1593 = vld [vmem:[%s789 + $0x38] sm:$0xf]
        %v1594 = vld [vmem:[%s789 + $0x3c] sm:$0xf]
        %v1595 = vld [vmem:[%s789 + $0x40] sm:$0xf]
        %v1596 = vld [vmem:[%s789 + $0x44] sm:$0xf]
        %v1597 = vld [vmem:[%s789 + $0x48] sm:$0xf]
        %v1598 = vld [vmem:[%s789 + $0x4c] sm:$0xf]
        %v1599 = vld [vmem:[%s789 + $0x50] sm:$0xf]
        %v1600 = vld [vmem:[%s789 + $0x54] sm:$0xf]
        %v1601 = vld [vmem:[%s789 + $0x58] sm:$0xf]
        %v1602 = vld [vmem:[%s789 + $0x5c] sm:$0xf]
        %v1603 = vld [vmem:[%s789 + $0x60] sm:$0xf]
        %v1604 = vld [vmem:[%s789 + $0x64] sm:$0xf]
        %v1605 = vld [vmem:[%s789 + $0x68] sm:$0xf]
        %v1606 = vld [vmem:[%s789 + $0x6c] sm:$0xf]
        %v1607 = vld [vmem:[%s789 + $0x70] sm:$0xf]
        %v1608 = vld [vmem:[%s789 + $0x74] sm:$0xf]
        %v1609 = vld [vmem:[%s789 + $0x78] sm:$0xf]
        %v1610 = vld [vmem:[%s789 + $0x7c] sm:$0xf]
        %v1611 = vld [vmem:[%s792] sm:$0x1]
        %v1613 = vlaneseq
        %v1614 = vshrl.u32 %v1613, 7
        %v1615 = vsub.s32 0, %v1614
        %v1616 = vrot.slane %v1611, %v1615
        %v1620 = vunpack.c.l.b16 %v1577
        %v1621 = vunpack.c.h.b16 %v1577
        %v1622 = vunpack.c.l.b16 %v1578
        %v1623 = vunpack.c.h.b16 %v1578
        %v1624 = vpack.c.b16 %v1622, %v1620
        %v1625 = vpack.c.b16 %v1623, %v1621
        %v1660 = vunpack.c.l.b16 %v1579
        %v1661 = vunpack.c.l.b16 %v1580
        %v1662 = vunpack.c.l.b16 %v1581
        %v1663 = vunpack.c.l.b16 %v1582
        %v1664 = vunpack.c.l.b16 %v1583
        %v1665 = vunpack.c.l.b16 %v1584
        %v1666 = vunpack.c.l.b16 %v1585
        %v1667 = vunpack.c.l.b16 %v1586
        %v1668 = vunpack.c.l.b16 %v1587
        %v1669 = vunpack.c.l.b16 %v1588
        %v1670 = vunpack.c.l.b16 %v1589
        %v1671 = vunpack.c.l.b16 %v1590
        %v1672 = vunpack.c.l.b16 %v1591
        %v1673 = vunpack.c.l.b16 %v1592
        %v1674 = vunpack.c.l.b16 %v1593
        %v1675 = vunpack.c.l.b16 %v1594
        %v1676 = vunpack.c.l.b16 %v1595
        %v1677 = vunpack.c.l.b16 %v1596
        %v1678 = vunpack.c.l.b16 %v1597
        %v1679 = vunpack.c.l.b16 %v1598
        %v1680 = vunpack.c.l.b16 %v1599
        %v1681 = vunpack.c.l.b16 %v1600
        %v1682 = vunpack.c.l.b16 %v1601
        %v1683 = vunpack.c.l.b16 %v1602
        %v1684 = vunpack.c.l.b16 %v1603
        %v1685 = vunpack.c.l.b16 %v1604
        %v1686 = vunpack.c.l.b16 %v1605
        %v1687 = vunpack.c.l.b16 %v1606
        %v1688 = vunpack.c.l.b16 %v1607
        %v1689 = vunpack.c.l.b16 %v1608
        %v1690 = vunpack.c.l.b16 %v1609
        %v1691 = vunpack.c.l.b16 %v1610
        %v1692 = vpack.c.b16 %v1661, %v1660
        %v1693 = vpack.c.b16 %v1663, %v1662
        %v1694 = vpack.c.b16 %v1665, %v1664
        %v1695 = vpack.c.b16 %v1667, %v1666
        %v1696 = vpack.c.b16 %v1669, %v1668
        %v1697 = vpack.c.b16 %v1671, %v1670
        %v1698 = vpack.c.b16 %v1673, %v1672
        %v1699 = vpack.c.b16 %v1675, %v1674
        %v1700 = vpack.c.b16 %v1677, %v1676
        %v1701 = vpack.c.b16 %v1679, %v1678
        %v1702 = vpack.c.b16 %v1681, %v1680
        %v1703 = vpack.c.b16 %v1683, %v1682
        %v1704 = vpack.c.b16 %v1685, %v1684
        %v1705 = vpack.c.b16 %v1687, %v1686
        %v1706 = vpack.c.b16 %v1689, %v1688
        %v1707 = vpack.c.b16 %v1691, %v1690
        %1724 = vmatprep.subr.bf16.mxu0 0
        %1725 = vmatpush1.bf16.msra.mxu0 %v1699
        %1726 = vmatprep.subr.bf16.mxu0 0
        %1727 = vmatpush1.bf16.msra.mxu0 %v1698
        %1728 = vmatprep.subr.bf16.mxu0 0
        %1729 = vmatpush1.bf16.msra.mxu0 %v1697
        %1730 = vmatprep.subr.bf16.mxu0 0
        %1731 = vmatpush1.bf16.msra.mxu0 %v1696
        %1732 = vmatprep.subr.bf16.mxu0 0
        %1733 = vmatpush1.bf16.msra.mxu0 %v1695
        %1734 = vmatprep.subr.bf16.mxu0 0
        %1735 = vmatpush1.bf16.msra.mxu0 %v1694
        %1736 = vmatprep.subr.bf16.mxu0 0
        %1737 = vmatpush1.bf16.msra.mxu0 %v1693
        %1738 = vmatprep.subr.bf16.mxu0 0
        %1739 = vmatpush1.bf16.msra.mxu0 %v1692
        %1740 = vmatprep.subr.bf16.mxu0 0
        %1741 = vmatpush2.bf16.msra.mxu0 %v1707
        %1742 = vmatprep.subr.bf16.mxu0 0
        %1743 = vmatpush2.bf16.msra.mxu0 %v1706
        %1744 = vmatprep.subr.bf16.mxu0 0
        %1745 = vmatpush2.bf16.msra.mxu0 %v1705
        %1746 = vmatprep.subr.bf16.mxu0 0
        %1747 = vmatpush2.bf16.msra.mxu0 %v1704
        %1748 = vmatprep.subr.bf16.mxu0 0
        %1749 = vmatpush2.bf16.msra.mxu0 %v1703
        %1750 = vmatprep.subr.bf16.mxu0 0
        %1751 = vmatpush2.bf16.msra.mxu0 %v1702
        %1752 = vmatprep.subr.bf16.mxu0 0
        %1753 = vmatpush2.bf16.msra.mxu0 %v1701
        %1754 = vmatprep.subr.bf16.mxu0 0
        %1755 = vmatpush2.bf16.msra.mxu0 %v1700
        %1756 = vmatprep.mubr.bf16.mxu0 %v1625
        %1757 = vmatmul.mubr.bf16.gmra.mxu0 %v1624
        %v1758 = vpop.f32.mrf.mxu0
        %v1759 = vadd.f32 %v1616, %v1758
        %v1760 = vpop.f32.mrf.mxu0
        %v1761 = vpop.f32.mrf.mxu0
        %v1762 = vadd.f32 %v1616, %v1761
        %v1763 = vpop.f32.mrf.mxu0
        %1764 = vdwg.mxu0
        %v1765 = vadd.f32 %v817, %v1759
        %v1766 = vadd.f32 %v818, %v1762
        %v1767 = vld [vmem:[%s637] sm:$0x1]
        %v1768 = vld [vmem:[%s645] sm:$0x1]
        %1769 = vadd.xlane.f32.xlu0 %v1765
        %v1770 = vpop.xlane.xlu0 %1769
        %1771 = vadd.xlane.f32.xlu0 %v1766
        %v1772 = vpop.xlane.xlu0 %1771
        %v1773 = vmul.f32 %v1770, 0.03125
        %v1774 = vmul.f32 %v1772, 0.03125
        %v1775 = vsub.f32 %v1765, %v1773
        %v1776 = vsub.f32 %v1766, %v1774
        %v1777 = vmul.f32 %v1775, %v816
        %v1778 = vmul.f32 %v1776, %v816
        %v1779 = vmul.f32 %v1777, %v1777
        %v1780 = vmul.f32 %v1778, %v1778
        %1781 = vadd.xlane.f32.xlu0 %v1779
        %v1782 = vpop.xlane.xlu0 %1781
        %1783 = vadd.xlane.f32.xlu0 %v1780
        %v1784 = vpop.xlane.xlu0 %1783
        %v1785 = vmul.f32 %v1782, 0.032258064
        %v1786 = vmul.f32 %v1784, 0.032258064
        %v1787 = vrsqrt.pop %v1785
        %v1788 = vmul.f32 %v1785, %v1787
        %vm1789 = vcmp.eq.f32.partialorder %v1785, inf
        %v1790 = vsel %vm1789, %v1785, %v1788
        %vm1791 = vcmp.eq.f32.partialorder %v1785, 0.0
        %v1792 = vand.u32 %v1785, 2147483648
        %v1793 = vsel %vm1791, %v1792, %v1790
        %v1794 = vrsqrt.pop %v1786
        %v1795 = vmul.f32 %v1786, %v1794
        %vm1796 = vcmp.eq.f32.partialorder %v1786, inf
        %v1797 = vsel %vm1796, %v1786, %v1795
        %vm1798 = vcmp.eq.f32.partialorder %v1786, 0.0
        %v1799 = vand.u32 %v1786, 2147483648
        %v1800 = vsel %vm1798, %v1799, %v1797
        %v1801 = vadd.f32 %v1793, 1e-06
        %v1802 = vadd.f32 %v1800, 1e-06
        %v1803 = vrcp.pop %v1801
        %v1804 = vmul.f32 1.0, %v1803
        %v1805 = vrcp.pop %v1802
        %v1806 = vmul.f32 1.0, %v1805
        %v1807 = vmul.f32 %v1777, %v1804
        %v1808 = vmul.f32 %v1778, %v1806
        %v1810 = vlaneseq
        %v1811 = vshrl.u32 %v1810, 7
        %v1812 = vsub.s32 0, %v1811
        %v1813 = vrot.slane %v1767, %v1812
        %v1815 = vmul.f32 %v1813, %v1807
        %v1816 = vmul.f32 %v1813, %v1808
        %v1818 = vlaneseq
        %v1819 = vshrl.u32 %v1818, 7
        %v1820 = vsub.s32 0, %v1819
        %v1821 = vrot.slane %v1768, %v1820
        %v1823 = vadd.f32 %v1815, %v1821
        %v1824 = vadd.f32 %v1816, %v1821
        %v1825 = vpack.c.bf16 %v1824, %v1823
        %v1826 = vld [vmem:[%s797] sm:$0xf]
        %v1827 = vld [vmem:[%s797 + $0x4] sm:$0xf]
        %v1828 = vld [vmem:[%s797 + $0x8] sm:$0xf]
        %v1829 = vld [vmem:[%s797 + $0xc] sm:$0xf]
        %v1830 = vld [vmem:[%s797 + $0x10] sm:$0xf]
        %v1831 = vld [vmem:[%s797 + $0x14] sm:$0xf]
        %v1832 = vld [vmem:[%s797 + $0x18] sm:$0xf]
        %v1833 = vld [vmem:[%s797 + $0x1c] sm:$0xf]
        %v1834 = vld [vmem:[%s797 + $0x20] sm:$0xf]
        %v1835 = vld [vmem:[%s797 + $0x24] sm:$0xf]
        %v1836 = vld [vmem:[%s797 + $0x28] sm:$0xf]
        %v1837 = vld [vmem:[%s797 + $0x2c] sm:$0xf]
        %v1838 = vld [vmem:[%s797 + $0x30] sm:$0xf]
        %v1839 = vld [vmem:[%s797 + $0x34] sm:$0xf]
        %v1840 = vld [vmem:[%s797 + $0x38] sm:$0xf]
        %v1841 = vld [vmem:[%s797 + $0x3c] sm:$0xf]
        %v1842 = vld [vmem:[%s653] sm:$0x1]
        %v1844 = vlaneseq
        %v1845 = vshrl.u32 %v1844, 7
        %v1846 = vsub.s32 0, %v1845
        %v1847 = vrot.slane %v1842, %v1846
        %v1865 = vunpack.c.l.b16 %v1826
        %v1866 = vunpack.c.l.b16 %v1827
        %v1867 = vunpack.c.l.b16 %v1828
        %v1868 = vunpack.c.l.b16 %v1829
        %v1869 = vunpack.c.l.b16 %v1830
        %v1870 = vunpack.c.l.b16 %v1831
        %v1871 = vunpack.c.l.b16 %v1832
        %v1872 = vunpack.c.l.b16 %v1833
        %v1873 = vunpack.c.l.b16 %v1834
        %v1874 = vunpack.c.l.b16 %v1835
        %v1875 = vunpack.c.l.b16 %v1836
        %v1876 = vunpack.c.l.b16 %v1837
        %v1877 = vunpack.c.l.b16 %v1838
        %v1878 = vunpack.c.l.b16 %v1839
        %v1879 = vunpack.c.l.b16 %v1840
        %v1880 = vunpack.c.l.b16 %v1841
        %v1881 = vpack.c.b16 %v1866, %v1865
        %v1882 = vpack.c.b16 %v1868, %v1867
        %v1883 = vpack.c.b16 %v1870, %v1869
        %v1884 = vpack.c.b16 %v1872, %v1871
        %v1885 = vpack.c.b16 %v1874, %v1873
        %v1886 = vpack.c.b16 %v1876, %v1875
        %v1887 = vpack.c.b16 %v1878, %v1877
        %v1888 = vpack.c.b16 %v1880, %v1879
        %1897 = vmatprep.subr.bf16.mxu0 0
        %1898 = vmatpush1.bf16.msra.mxu0 %v1888
        %1899 = vmatprep.subr.bf16.mxu0 0
        %1900 = vmatpush1.bf16.msra.mxu0 %v1887
        %1901 = vmatprep.subr.bf16.mxu0 0
        %1902 = vmatpush1.bf16.msra.mxu0 %v1886
        %1903 = vmatprep.subr.bf16.mxu0 0
        %1904 = vmatpush1.bf16.msra.mxu0 %v1885
        %1905 = vmatprep.subr.bf16.mxu0 0
        %1906 = vmatpush1.bf16.msra.mxu0 %v1884
        %1907 = vmatprep.subr.bf16.mxu0 0
        %1908 = vmatpush1.bf16.msra.mxu0 %v1883
        %1909 = vmatprep.subr.bf16.mxu0 0
        %1910 = vmatpush1.bf16.msra.mxu0 %v1882
        %1911 = vmatprep.subr.bf16.mxu0 0
        %1912 = vmatpush1.bf16.msra.mxu0 %v1881
        %1913 = vmatprep.subr.bf16.mxu0 0
        %1914 = vmatpush2.bf16.msra.mxu0 0
        %1915 = vmatprep.subr.bf16.mxu0 0
        %1916 = vmatpush2.bf16.msra.mxu0 0
        %1917 = vmatprep.subr.bf16.mxu0 0
        %1918 = vmatpush2.bf16.msra.mxu0 0
        %1919 = vmatprep.subr.bf16.mxu0 0
        %1920 = vmatpush2.bf16.msra.mxu0 0
        %1921 = vmatprep.subr.bf16.mxu0 0
        %1922 = vmatpush2.bf16.msra.mxu0 0
        %1923 = vmatprep.subr.bf16.mxu0 0
        %1924 = vmatpush2.bf16.msra.mxu0 0
        %1925 = vmatprep.subr.bf16.mxu0 0
        %1926 = vmatpush2.bf16.msra.mxu0 0
        %1927 = vmatprep.subr.bf16.mxu0 0
        %1928 = vmatpush2.bf16.msra.mxu0 0
        %1929 = vmatprep.mubr.bf16.mxu0 0
        %1930 = vmatmul.mubr.bf16.gmra.mxu0 %v1825
        %v1931 = vpop.f32.mrf.mxu0
        %v1932 = vadd.f32 %v1847, %v1931
        %v1933 = vpop.f32.mrf.mxu0
        %v1934 = vpop.f32.mrf.mxu0
        %v1935 = vadd.f32 %v1847, %v1934
        %v1936 = vpop.f32.mrf.mxu0
        %1937 = vdwg.mxu0
        %v1938 = vmul.f32 %v1932, 0.5
        %v1939 = vmul.f32 %v1935, 0.5
        %v1940 = vmul.f32 %v1932, 0.044715
        %v1941 = vmul.f32 %v1935, 0.044715
        %v1942 = vmul.f32 %v1940, %v1932
        %v1943 = vmul.f32 %v1941, %v1935
        %v1944 = vmul.f32 %v1942, %v1932
        %v1945 = vmul.f32 %v1943, %v1935
        %v1946 = vadd.f32 %v1932, %v1944
        %v1947 = vadd.f32 %v1935, %v1945
        %v1948 = vmul.f32 %v1946, 0.7978845
        %v1949 = vmul.f32 %v1947, 0.7978845
        %v1950 = vtanh.pop %v1948
        %v1951 = vtanh.pop %v1949
        %v1952 = vadd.f32 %v1950, 1.0
        %v1953 = vadd.f32 %v1951, 1.0
        %v1954 = vmul.f32 %v1938, %v1952
        %v1955 = vmul.f32 %v1939, %v1953
        %v1956 = vpack.c.bf16 %v1955, %v1954
        %v1957 = vld [vmem:[%s662] sm:$0xf]
        %v1958 = vld [vmem:[%s662 + $0x4] sm:$0xf]
        %v1959 = vld [vmem:[%s662 + $0x8] sm:$0xf]
        %v1960 = vld [vmem:[%s662 + $0xc] sm:$0xf]
        %v1961 = vld [vmem:[%s662 + $0x10] sm:$0xf]
        %v1962 = vld [vmem:[%s662 + $0x14] sm:$0xf]
        %v1963 = vld [vmem:[%s662 + $0x18] sm:$0xf]
        %v1964 = vld [vmem:[%s662 + $0x1c] sm:$0xf]
        %v1965 = vld [vmem:[%s662 + $0x20] sm:$0xf]
        %v1966 = vld [vmem:[%s662 + $0x24] sm:$0xf]
        %v1967 = vld [vmem:[%s662 + $0x28] sm:$0xf]
        %v1968 = vld [vmem:[%s662 + $0x2c] sm:$0xf]
        %v1969 = vld [vmem:[%s662 + $0x30] sm:$0xf]
        %v1970 = vld [vmem:[%s662 + $0x34] sm:$0xf]
        %v1971 = vld [vmem:[%s662 + $0x38] sm:$0xf]
        %v1972 = vld [vmem:[%s662 + $0x3c] sm:$0xf]
        %v1989 = vunpack.c.l.b16 %v1957
        %v1990 = vunpack.c.l.b16 %v1958
        %v1991 = vunpack.c.l.b16 %v1959
        %v1992 = vunpack.c.l.b16 %v1960
        %v1993 = vunpack.c.l.b16 %v1961
        %v1994 = vunpack.c.l.b16 %v1962
        %v1995 = vunpack.c.l.b16 %v1963
        %v1996 = vunpack.c.l.b16 %v1964
        %v1997 = vunpack.c.l.b16 %v1965
        %v1998 = vunpack.c.l.b16 %v1966
        %v1999 = vunpack.c.l.b16 %v1967
        %v2000 = vunpack.c.l.b16 %v1968
        %v2001 = vunpack.c.l.b16 %v1969
        %v2002 = vunpack.c.l.b16 %v1970
        %v2003 = vunpack.c.l.b16 %v1971
        %v2004 = vunpack.c.l.b16 %v1972
        %v2005 = vpack.c.b16 %v1990, %v1989
        %v2006 = vpack.c.b16 %v1992, %v1991
        %v2007 = vpack.c.b16 %v1994, %v1993
        %v2008 = vpack.c.b16 %v1996, %v1995
        %v2009 = vpack.c.b16 %v1998, %v1997
        %v2010 = vpack.c.b16 %v2000, %v1999
        %v2011 = vpack.c.b16 %v2002, %v2001
        %v2012 = vpack.c.b16 %v2004, %v2003
        %2021 = vmatprep.subr.bf16.mxu0 0
        %2022 = vmatpush1.bf16.msra.mxu0 %v2012
        %2023 = vmatprep.subr.bf16.mxu0 0
        %2024 = vmatpush1.bf16.msra.mxu0 %v2011
        %2025 = vmatprep.subr.bf16.mxu0 0
        %2026 = vmatpush1.bf16.msra.mxu0 %v2010
        %2027 = vmatprep.subr.bf16.mxu0 0
        %2028 = vmatpush1.bf16.msra.mxu0 %v2009
        %2029 = vmatprep.subr.bf16.mxu0 0
        %2030 = vmatpush1.bf16.msra.mxu0 %v2008
        %2031 = vmatprep.subr.bf16.mxu0 0
        %2032 = vmatpush1.bf16.msra.mxu0 %v2007
        %2033 = vmatprep.subr.bf16.mxu0 0
        %2034 = vmatpush1.bf16.msra.mxu0 %v2006
        %2035 = vmatprep.subr.bf16.mxu0 0
        %2036 = vmatpush1.bf16.msra.mxu0 %v2005
        %2037 = vmatprep.subr.bf16.mxu0 0
        %2038 = vmatpush2.bf16.msra.mxu0 0
        %2039 = vmatprep.subr.bf16.mxu0 0
        %2040 = vmatpush2.bf16.msra.mxu0 0
        %2041 = vmatprep.subr.bf16.mxu0 0
        %2042 = vmatpush2.bf16.msra.mxu0 0
        %2043 = vmatprep.subr.bf16.mxu0 0
        %2044 = vmatpush2.bf16.msra.mxu0 0
        %2045 = vmatprep.subr.bf16.mxu0 0
        %2046 = vmatpush2.bf16.msra.mxu0 0
        %2047 = vmatprep.subr.bf16.mxu0 0
        %2048 = vmatpush2.bf16.msra.mxu0 0
        %2049 = vmatprep.subr.bf16.mxu0 0
        %2050 = vmatpush2.bf16.msra.mxu0 0
        %2051 = vmatprep.subr.bf16.mxu0 0
        %2052 = vmatpush2.bf16.msra.mxu0 0
        %2053 = vmatprep.mubr.bf16.mxu0 0
        %2054 = vmatmul.mubr.bf16.gmra.mxu0 %v1956
        %v2055 = vpop.f32.mrf.mxu0
        %v2056 = vadd.f32 0.0, %v2055
        %v2057 = vpop.f32.mrf.mxu0
        %v2058 = vpop.f32.mrf.mxu0
        %v2059 = vadd.f32 0.0, %v2058
        %v2060 = vpop.f32.mrf.mxu0
        %2061 = vdwg.mxu0
        %v2062 = vadd.f32 %v1765, %v2056
        %v2063 = vadd.f32 %v1766, %v2059
        %v2064 = vld [vmem:[%s670] sm:$0x1]
        %v2066 = vlaneseq
        %v2067 = vshrl.u32 %v2066, 7
        %v2068 = vsub.s32 0, %v2067
        %v2069 = vrot.slane %v2064, %v2068
        %v2071 = vadd.f32 %v2062, %v2069
        %v2072 = vadd.f32 %v2063, %v2069
        %2073 = vst [vmem:[%s802] sm:$0xff] %v2071
        %2074 = vst [vmem:[%s802 + $0x8] sm:$0xff] %v2072
        %p2075 = scmp.lt.s32.totalorder %s41, 1
        %s2076 = scalar_select %p2075, %s41, 1
        %s2077 = smul.addr %s2076, 2
        %s2078 = smul.addr %s2077, 8
        %s2079 = scalar_lea.vmem %s14, %s2078
        // Predicated region
        $region105: #{bert4rec_forward.2} parent=75 // pred_check
          %p2080 = pneg %p431
        $region106: #{bert4rec_forward.2} parent=75 // pred_check_branch
          %2082 = sbr.rel (%p2080) target = $region108
        $region107: #{bert4rec_forward.2} parent=75 // pred_region
          _
        $region108: #{bert4rec_forward.2} parent=75 // pred_fallthru
          _
      $region76: #{bert4rec_forward.2} parent=5 // pred_fallthru
        _
      %p2083 = scmp.le.s32.totalorder 2, %s32
      // Predicated region
      $region109: #{bert4rec_forward.2} parent=5 // pred_check
        %p2084 = pneg %p2083
      $region110: #{bert4rec_forward.2} parent=5 // pred_check_branch
        %2086 = sbr.rel (%p2084) target = $region112
      $region111: #{bert4rec_forward.2} parent=5 // pred_region
        %s2087 = ssub.s32 %s32, 2
        // Predicated region
        $region113: #{bert4rec_forward.2} parent=111 // pred_check
          %p2088 = pneg %p437
        $region114: #{bert4rec_forward.2} parent=111 // pred_check_branch
          %2090 = sbr.rel (%p2088) target = $region116
        $region115: #{bert4rec_forward.2} parent=111 // pred_region
          %p2091 = scmp.lt.s32.totalorder %s43, 1
          %s2092 = scalar_select %p2091, %s43, 1
          %s2093 = smul.addr %s2092, 2
          %s2094 = smul.addr %s2093, 8
          %s2095 = scalar_lea.vmem %s14, %s2094
        $region116: #{bert4rec_forward.2} parent=111 // pred_fallthru
          _
      $region112: #{bert4rec_forward.2} parent=5 // pred_fallthru
        _
    $region6: #{bert4rec_forward.2} parent=1 // loop_footer
      %s36 = sadd.s32 1, %s32
    $region7: #{bert4rec_forward.2} parent=1 // loop_footer_branch
      %31 = sbr.rel target = $region3
    $region8: #{bert4rec_forward.2} parent=1 // loop_exit
      _
    %2096 = vsyncpa [#allocation4], 1
    %s2097 = scalar_lea.sflag [#allocation4], 1
    %2098 = vsyncpa %s2097, 1
    %2099 = vsyncpa [#allocation6], 1
    %s2100 = scalar_lea.sflag [#allocation6], 1
    %2101 = vsyncpa %s2100, 1
    %2102 = vsyncpa [#allocation9], 1
    %s2103 = scalar_lea.sflag [#allocation9], 1
    %2104 = vsyncpa %s2103, 1
    %2105 = vsyncpa [#allocation12], 1
    %s2106 = scalar_lea.sflag [#allocation12], 1
    %2107 = vsyncpa %s2106, 1

</llo_original>
